<compile_context>
chip_gen: v7x
topology: tpu7x:2x2x1
jax: 0.10.0
libtpu: 0.0.40
codegen_flags: <defaults>
</compile_context>

<pallas_src>
import functools

import jax
import jax.numpy as jnp
from jax import lax
from jax.experimental import pallas as pl
from jax.experimental.pallas import tpu as pltpu


def _oab_kernel(x_ref, p_ref,
                wp1_ref, bp1_ref, wp2_ref, bp2_ref,
                wo1_ref, bo1_ref, wo2_ref, bo2_ref,
                wd_ref, bd_ref, wu_ref, bu_ref,
                out_ref, *, key_channels):
    """One (batch, pixel-tile) per grid step. Channels on sublanes, pixels on lanes."""
    x = x_ref[0].astype(jnp.bfloat16)      # [C,  TQ]
    p = p_ref[0].astype(jnp.bfloat16)      # [C,  M ]

    dn0 = (((0,), (0,)), ((), ()))         # contract first axis of both operands

    def lin_relu(w_ref, b_ref, a):
        # w: [Cin, Cout] bf16, a: [Cin, T] bf16  ->  relu(w^T a + b): [Cout, T] f32
        y = lax.dot_general(w_ref[...], a, dn0, preferred_element_type=jnp.float32)
        return jnp.maximum(y + b_ref[...], 0.0)

    # f_pixel : conv1x1+BN+ReLU x2 -> query [K, TQ]
    q = lin_relu(wp2_ref, bp2_ref,
                 lin_relu(wp1_ref, bp1_ref, x).astype(jnp.bfloat16))
    # f_object: conv1x1+BN+ReLU x2 -> key   [K, M]   (tiny, recomputed per tile)
    k = lin_relu(wo2_ref, bo2_ref,
                 lin_relu(wo1_ref, bo1_ref, p).astype(jnp.bfloat16))
    # f_down  : conv1x1+BN+ReLU    -> value [K, M]
    v = lin_relu(wd_ref, bd_ref, p)

    # sim[M, TQ] = key^T @ query (contract over K), scaled; softmax over M (f32).
    sim = lax.dot_general(k.astype(jnp.bfloat16), q.astype(jnp.bfloat16), dn0,
                          preferred_element_type=jnp.float32)
    sim = sim * (float(key_channels) ** -0.5)
    sim = sim - jnp.max(sim, axis=0, keepdims=True)
    e = jnp.exp(sim)
    denom = jnp.sum(e, axis=0, keepdims=True)                 # [1, TQ]
    attn = e * pl.reciprocal(denom, approx=True)              # [M, TQ]

    # context[K, TQ] = value @ attn  (contract over M)
    ctx = lax.dot_general(v.astype(jnp.bfloat16), attn.astype(jnp.bfloat16),
                          (((1,), (0,)), ((), ())),
                          preferred_element_type=jnp.float32)

    # f_up: conv1x1+BN+ReLU -> [C, TQ]
    out = lax.dot_general(wu_ref[...], ctx.astype(jnp.bfloat16), dn0,
                          preferred_element_type=jnp.float32)
    out = jnp.maximum(out + bu_ref[...], 0.0)
    out_ref[0] = out.astype(out_ref.dtype)


def _fold_bn(w_oi, gamma, beta, eps=1e-5):
    """Fold inference-mode BN (mean=0, var=1) into a 1x1 conv.

    w_oi: conv weight [out, in]  ->  (w_eff [in, out] bf16, bias [out, 1] f32)
    so relu(dot_general(w_eff, x_CT, contract channel) + bias) == ReLU(BN(Conv1x1(x))).
    """
    scale = gamma / jnp.sqrt(1.0 + eps)          # running_var = 1, running_mean = 0
    w_eff = (w_oi.T * scale[None, :]).astype(jnp.bfloat16)    # [in, out]
    bias = beta.reshape(-1, 1).astype(jnp.float32)            # [out, 1]
    return w_eff, bias


def _pick_tile(hw, max_tile):
    """Largest 128-multiple divisor of hw that is <= max_tile (or hw itself)."""
    if hw <= max_tile:
        return hw
    best = None
    t = 128
    while t <= max_tile:
        if hw % t == 0:
            best = t
        t += 128
    return best if best is not None else hw


def object_attention_block(x_nchw, proxy_nchw, params, key_channels, *, max_tile=2048):
    N, C, H, W = x_nchw.shape
    _, _, Mh, Mw = proxy_nchw.shape
    HW, M = H * W, Mh * Mw
    K = key_channels

    # NCHW -> channels-on-sublane layout: reshape only, no transpose.
    x_tok = x_nchw.reshape(N, C, HW)         # [N, C, HW]
    p_tok = proxy_nchw.reshape(N, C, M)      # [N, C, M]

    TQ = _pick_tile(HW, max_tile)
    num_tiles = HW // TQ
    grid = (N, num_tiles)

    (wp1, bp1), (wp2, bp2) = params["f_pixel"]
    (wo1, bo1), (wo2, bo2) = params["f_object"]
    (wd, bd) = params["f_down"]
    (wu, bu) = params["f_up"]
    weight_args = (wp1, bp1, wp2, bp2, wo1, bo1, wo2, bo2, wd, bd, wu, bu)

    def full_spec(arr):
        return pl.BlockSpec(arr.shape, lambda n, t: (0, 0))   # resident, DMA'd once

    kernel = functools.partial(_oab_kernel, key_channels=key_channels)

    # Advisory cost estimate for the XLA scheduler.
    itm = jnp.dtype(x_nchw.dtype).itemsize
    w_bytes = sum(int(a.size) * a.dtype.itemsize for a in weight_args)
    flops = int(N * (2 * HW * C * K + 2 * HW * K * K          # f_pixel
                     + 2 * HW * M * K * 2                     # sim + ctx
                     + 2 * HW * K * C                         # f_up
                     + num_tiles * (2 * M * C * K * 2 + 2 * M * K * K)))  # f_object/f_down per tile
    cost = pl.CostEstimate(
        flops=flops,
        transcendentals=int(N * HW * M),
        bytes_accessed=int(2 * N * C * HW * itm + N * C * M * itm + w_bytes),
    )

    # VMEM budget: double-buffered x/out/proxy tiles + resident weights + margin.
    block_bytes = C * TQ * itm
    vmem_limit = int(min(max(4 * (2 * block_bytes + C * M * itm) + 2 * w_bytes + (4 << 20),
                             8 << 20),
                         48 << 20))

    out_tok = pl.pallas_call(
        kernel,
        out_shape=jax.ShapeDtypeStruct((N, C, HW), x_nchw.dtype),
        grid_spec=pltpu.PrefetchScalarGridSpec(
            num_scalar_prefetch=0,
            grid=grid,
            in_specs=[
                pl.BlockSpec((1, C, TQ), lambda n, t: (n, 0, t)),
                pl.BlockSpec((1, C, M), lambda n, t: (n, 0, 0)),
                full_spec(wp1), full_spec(bp1), full_spec(wp2), full_spec(bp2),
                full_spec(wo1), full_spec(bo1), full_spec(wo2), full_spec(bo2),
                full_spec(wd), full_spec(bd), full_spec(wu), full_spec(bu),
            ],
            out_specs=pl.BlockSpec((1, C, TQ), lambda n, t: (n, 0, t)),
        ),
        compiler_params=pltpu.CompilerParams(
            dimension_semantics=("parallel", "parallel"),
            vmem_limit_bytes=vmem_limit,
        ),
        cost_estimate=cost,
    )(x_tok, p_tok, *weight_args)

    # Channels-on-sublane layout -> NCHW: reshape only.
    return out_tok.reshape(N, C, H, W)


def _reference(x_nchw, proxy_nchw, params, key_channels):
    """Pure-JAX f32 reference mirroring the PyTorch forward (scale=1)."""
    N, C, H, W = x_nchw.shape
    _, _, Mh, Mw = proxy_nchw.shape
    HW, M = H * W, Mh * Mw
    x = x_nchw.reshape(N, C, HW).astype(jnp.float32)
    p = proxy_nchw.reshape(N, C, M).astype(jnp.float32)

    def lr(w, b, a):  # w: [Cin, Cout], b: [Cout, 1], a: [N, Cin, T]
        y = jnp.einsum("io,nit->not", w.astype(jnp.float32), a) + b[None]
        return jnp.maximum(y, 0.0)

    (wp1, bp1), (wp2, bp2) = params["f_pixel"]
    (wo1, bo1), (wo2, bo2) = params["f_object"]
    (wd, bd) = params["f_down"]
    (wu, bu) = params["f_up"]

    q = lr(wp2, bp2, lr(wp1, bp1, x))              # [N, K, HW]
    k = lr(wo2, bo2, lr(wo1, bo1, p))              # [N, K, M]
    v = lr(wd, bd, p)                              # [N, K, M]
    sim = jnp.einsum("nkm,nkq->nmq", k, q) * (float(key_channels) ** -0.5)
    attn = jax.nn.softmax(sim, axis=1)             # softmax over M
    ctx = jnp.einsum("nkm,nmq->nkq", v, attn)      # [N, K, HW]
    out = jnp.maximum(jnp.einsum("kc,nkq->ncq", wu.astype(jnp.float32), ctx) + bu[None], 0.0)
    return out.reshape(N, C, H, W)


def _make_params(key, in_channels, key_channels):
    ks = jax.random.split(key, 16)
    i = iter(range(16))

    def conv_bn(kw, kg, kb, cin, cout):
        w = jax.random.normal(kw, (cout, cin), jnp.float32) * 0.1
        gamma = 1.0 + 0.1 * jax.random.normal(kg, (cout,), jnp.float32)
        beta = 0.1 * jax.random.normal(kb, (cout,), jnp.float32)
        return _fold_bn(w, gamma, beta)

    params = {
        "f_pixel": (
            conv_bn(ks[next(i)], ks[next(i)], ks[next(i)], in_channels, key_channels),
            conv_bn(ks[next(i)], ks[next(i)], ks[next(i)], key_channels, key_channels),
        ),
        "f_object": (
            conv_bn(ks[next(i)], ks[next(i)], ks[next(i)], in_channels, key_channels),
            conv_bn(ks[next(i)], ks[next(i)], ks[next(i)], key_channels, key_channels),
        ),
        "f_down": conv_bn(ks[next(i)], ks[next(i)], ks[next(i)], in_channels, key_channels),
        "f_up": conv_bn(ks[13], ks[14], ks[15], key_channels, in_channels),
    }
    return params


if __name__ == "__main__":
    in_channels = 32
    key_channels = 16
    N, H, W = 2, 32, 32
    M_regions = 8                      # proxy: N x C x M x 1 (object regions)

    key = jax.random.PRNGKey(0)
    kx, kp, kparam = jax.random.split(key, 3)
    x = jax.random.normal(kx, (N, in_channels, H, W), jnp.float32)
    proxy = jax.random.normal(kp, (N, in_channels, M_regions, 1), jnp.float32)
    params = _make_params(kparam, in_channels, key_channels)

    # max_tile=512 -> grid (2, 2): exercises the tiled-HW pipeline path.
    out = object_attention_block(x, proxy, params, key_channels, max_tile=512)
    out = jax.block_until_ready(out)

    ref = _reference(x, proxy, params, key_channels)
    assert out.shape == (N, in_channels, H, W)
    max_err = float(jnp.max(jnp.abs(out - ref)))
    # bf16 MXU operands (f32 accumulation / f32 softmax) -> relaxed tolerance vs f32 ref.
    assert jnp.allclose(out, ref, atol=3e-2, rtol=3e-2), f"mismatch vs reference, max_err={max_err}"

    print("KERNEL_OK")
</pallas_src>

<mosaic_0001>
module attributes {stable_mosaic.version = 11 : i64} {
  func.func @_oab_kernel(%arg0: i32, %arg1: i32, %arg2: memref<1x32x512xf32, #tpu.memory_space<vmem>>, %arg3: memref<1x32x8xf32, #tpu.memory_space<vmem>>, %arg4: memref<32x16xbf16, #tpu.memory_space<vmem>>, %arg5: memref<16x1xf32, #tpu.memory_space<vmem>>, %arg6: memref<16x16xbf16, #tpu.memory_space<vmem>>, %arg7: memref<16x1xf32, #tpu.memory_space<vmem>>, %arg8: memref<32x16xbf16, #tpu.memory_space<vmem>>, %arg9: memref<16x1xf32, #tpu.memory_space<vmem>>, %arg10: memref<16x16xbf16, #tpu.memory_space<vmem>>, %arg11: memref<16x1xf32, #tpu.memory_space<vmem>>, %arg12: memref<32x16xbf16, #tpu.memory_space<vmem>>, %arg13: memref<16x1xf32, #tpu.memory_space<vmem>>, %arg14: memref<16x32xbf16, #tpu.memory_space<vmem>>, %arg15: memref<32x1xf32, #tpu.memory_space<vmem>>, %arg16: memref<1x32x512xf32, #tpu.memory_space<vmem>>) attributes {dimension_semantics = [#tpu.dimension_semantics<parallel>, #tpu.dimension_semantics<parallel>], iteration_bounds = array<i64: 2, 2>, scalar_prefetch = 0 : i64, scratch_operands = 0 : i64, tpu.core_type = #tpu.core_type<tc>, window_params = [{transform_indices = @transform_0, window_bounds = array<i64: 1, 32, 512>}, {transform_indices = @transform_1, window_bounds = array<i64: 1, 32, 8>}, {pipeline_mode = #tpu.pipeline_mode<synchronous>, transform_indices = @transform_2, window_bounds = array<i64: 32, 16>}, {pipeline_mode = #tpu.pipeline_mode<synchronous>, transform_indices = @transform_3, window_bounds = array<i64: 16, 1>}, {pipeline_mode = #tpu.pipeline_mode<synchronous>, transform_indices = @transform_4, window_bounds = array<i64: 16, 16>}, {pipeline_mode = #tpu.pipeline_mode<synchronous>, transform_indices = @transform_5, window_bounds = array<i64: 16, 1>}, {pipeline_mode = #tpu.pipeline_mode<synchronous>, transform_indices = @transform_6, window_bounds = array<i64: 32, 16>}, {pipeline_mode = #tpu.pipeline_mode<synchronous>, transform_indices = @transform_7, window_bounds = array<i64: 16, 1>}, {pipeline_mode = #tpu.pipeline_mode<synchronous>, transform_indices = @transform_8, window_bounds = array<i64: 16, 16>}, {pipeline_mode = #tpu.pipeline_mode<synchronous>, transform_indices = @transform_9, window_bounds = array<i64: 16, 1>}, {pipeline_mode = #tpu.pipeline_mode<synchronous>, transform_indices = @transform_10, window_bounds = array<i64: 32, 16>}, {pipeline_mode = #tpu.pipeline_mode<synchronous>, transform_indices = @transform_11, window_bounds = array<i64: 16, 1>}, {pipeline_mode = #tpu.pipeline_mode<synchronous>, transform_indices = @transform_12, window_bounds = array<i64: 16, 32>}, {pipeline_mode = #tpu.pipeline_mode<synchronous>, transform_indices = @transform_13, window_bounds = array<i64: 32, 1>}, {transform_indices = @transform_14, window_bounds = array<i64: 1, 32, 512>}]} {
    %c0 = arith.constant 0 : index
    %c0_0 = arith.constant 0 : index
    %c0_1 = arith.constant 0 : index
    %0 = vector.load %arg2[%c0, %c0_0, %c0_1] : memref<1x32x512xf32, #tpu.memory_space<vmem>>, vector<1x32x512xf32>
    %1 = vector.shape_cast %0 : vector<1x32x512xf32> to vector<32x512xf32>
    %2 = arith.truncf %1 : vector<32x512xf32> to vector<32x512xbf16>
    %c0_2 = arith.constant 0 : index
    %c0_3 = arith.constant 0 : index
    %c0_4 = arith.constant 0 : index
    %3 = vector.load %arg3[%c0_2, %c0_3, %c0_4] : memref<1x32x8xf32, #tpu.memory_space<vmem>>, vector<1x32x8xf32>
    %4 = vector.shape_cast %3 : vector<1x32x8xf32> to vector<32x8xf32>
    %5 = arith.truncf %4 : vector<32x8xf32> to vector<32x8xbf16>
    %c0_5 = arith.constant 0 : index
    %c0_6 = arith.constant 0 : index
    %6 = vector.load %arg4[%c0_5, %c0_6] : memref<32x16xbf16, #tpu.memory_space<vmem>>, vector<32x16xbf16>
    %cst = arith.constant dense<0.000000e+00> : vector<16x512xf32>
    %7 = tpu.matmul %6, %2, %cst {dimension_numbers = #tpu.dot_dimension_numbers<[0], [0], [1], [1], [0, 1, 1, 1], [], []>} : vector<32x16xbf16>, vector<32x512xbf16>, vector<16x512xf32> -> vector<16x512xf32>
    %c0_7 = arith.constant 0 : index
    %c0_8 = arith.constant 0 : index
    %8 = vector.load %arg5[%c0_7, %c0_8] : memref<16x1xf32, #tpu.memory_space<vmem>>, vector<16x1xf32>
    %9 = vector.broadcast %8 : vector<16x1xf32> to vector<16x512xf32>
    %10 = arith.addf %7, %9 : vector<16x512xf32>
    %cst_9 = arith.constant 0.000000e+00 : f32
    %11 = vector.broadcast %cst_9 : f32 to vector<16x512xf32>
    %12 = arith.maximumf %10, %11 : vector<16x512xf32>
    %13 = arith.truncf %12 : vector<16x512xf32> to vector<16x512xbf16>
    %c0_10 = arith.constant 0 : index
    %c0_11 = arith.constant 0 : index
    %14 = vector.load %arg6[%c0_10, %c0_11] : memref<16x16xbf16, #tpu.memory_space<vmem>>, vector<16x16xbf16>
    %cst_12 = arith.constant dense<0.000000e+00> : vector<16x512xf32>
    %15 = tpu.matmul %14, %13, %cst_12 {dimension_numbers = #tpu.dot_dimension_numbers<[0], [0], [1], [1], [0, 1, 1, 1], [], []>} : vector<16x16xbf16>, vector<16x512xbf16>, vector<16x512xf32> -> vector<16x512xf32>
    %c0_13 = arith.constant 0 : index
    %c0_14 = arith.constant 0 : index
    %16 = vector.load %arg7[%c0_13, %c0_14] : memref<16x1xf32, #tpu.memory_space<vmem>>, vector<16x1xf32>
    %17 = vector.broadcast %16 : vector<16x1xf32> to vector<16x512xf32>
    %18 = arith.addf %15, %17 : vector<16x512xf32>
    %cst_15 = arith.constant 0.000000e+00 : f32
    %19 = vector.broadcast %cst_15 : f32 to vector<16x512xf32>
    %20 = arith.maximumf %18, %19 : vector<16x512xf32>
    %c0_16 = arith.constant 0 : index
    %c0_17 = arith.constant 0 : index
    %21 = vector.load %arg8[%c0_16, %c0_17] : memref<32x16xbf16, #tpu.memory_space<vmem>>, vector<32x16xbf16>
    %cst_18 = arith.constant dense<0.000000e+00> : vector<16x8xf32>
    %22 = tpu.matmul %21, %5, %cst_18 {dimension_numbers = #tpu.dot_dimension_numbers<[0], [0], [1], [1], [0, 1, 1, 1], [], []>} : vector<32x16xbf16>, vector<32x8xbf16>, vector<16x8xf32> -> vector<16x8xf32>
    %c0_19 = arith.constant 0 : index
    %c0_20 = arith.constant 0 : index
    %23 = vector.load %arg9[%c0_19, %c0_20] : memref<16x1xf32, #tpu.memory_space<vmem>>, vector<16x1xf32>
    %24 = vector.broadcast %23 : vector<16x1xf32> to vector<16x8xf32>
    %25 = arith.addf %22, %24 : vector<16x8xf32>
    %cst_21 = arith.constant 0.000000e+00 : f32
    %26 = vector.broadcast %cst_21 : f32 to vector<16x8xf32>
    %27 = arith.maximumf %25, %26 : vector<16x8xf32>
    %28 = arith.truncf %27 : vector<16x8xf32> to vector<16x8xbf16>
    %c0_22 = arith.constant 0 : index
    %c0_23 = arith.constant 0 : index
    %29 = vector.load %arg10[%c0_22, %c0_23] : memref<16x16xbf16, #tpu.memory_space<vmem>>, vector<16x16xbf16>
    %cst_24 = arith.constant dense<0.000000e+00> : vector<16x8xf32>
    %30 = tpu.matmul %29, %28, %cst_24 {dimension_numbers = #tpu.dot_dimension_numbers<[0], [0], [1], [1], [0, 1, 1, 1], [], []>} : vector<16x16xbf16>, vector<16x8xbf16>, vector<16x8xf32> -> vector<16x8xf32>
    %c0_25 = arith.constant 0 : index
    %c0_26 = arith.constant 0 : index
    %31 = vector.load %arg11[%c0_25, %c0_26] : memref<16x1xf32, #tpu.memory_space<vmem>>, vector<16x1xf32>
    %32 = vector.broadcast %31 : vector<16x1xf32> to vector<16x8xf32>
    %33 = arith.addf %30, %32 : vector<16x8xf32>
    %cst_27 = arith.constant 0.000000e+00 : f32
    %34 = vector.broadcast %cst_27 : f32 to vector<16x8xf32>
    %35 = arith.maximumf %33, %34 : vector<16x8xf32>
    %c0_28 = arith.constant 0 : index
    %c0_29 = arith.constant 0 : index
    %36 = vector.load %arg12[%c0_28, %c0_29] : memref<32x16xbf16, #tpu.memory_space<vmem>>, vector<32x16xbf16>
    %cst_30 = arith.constant dense<0.000000e+00> : vector<16x8xf32>
    %37 = tpu.matmul %36, %5, %cst_30 {dimension_numbers = #tpu.dot_dimension_numbers<[0], [0], [1], [1], [0, 1, 1, 1], [], []>} : vector<32x16xbf16>, vector<32x8xbf16>, vector<16x8xf32> -> vector<16x8xf32>
    %c0_31 = arith.constant 0 : index
    %c0_32 = arith.constant 0 : index
    %38 = vector.load %arg13[%c0_31, %c0_32] : memref<16x1xf32, #tpu.memory_space<vmem>>, vector<16x1xf32>
    %39 = vector.broadcast %38 : vector<16x1xf32> to vector<16x8xf32>
    %40 = arith.addf %37, %39 : vector<16x8xf32>
    %cst_33 = arith.constant 0.000000e+00 : f32
    %41 = vector.broadcast %cst_33 : f32 to vector<16x8xf32>
    %42 = arith.maximumf %40, %41 : vector<16x8xf32>
    %43 = arith.truncf %35 : vector<16x8xf32> to vector<16x8xbf16>
    %44 = arith.truncf %20 : vector<16x512xf32> to vector<16x512xbf16>
    %cst_34 = arith.constant dense<0.000000e+00> : vector<8x512xf32>
    %45 = tpu.matmul %43, %44, %cst_34 {dimension_numbers = #tpu.dot_dimension_numbers<[0], [0], [1], [1], [0, 1, 1, 1], [], []>} : vector<16x8xbf16>, vector<16x512xbf16>, vector<8x512xf32> -> vector<8x512xf32>
    %cst_35 = arith.constant 2.500000e-01 : f32
    %46 = vector.broadcast %cst_35 : f32 to vector<8x512xf32>
    %47 = arith.mulf %45, %46 : vector<8x512xf32>
    %cst_36 = arith.constant dense<0xFF800000> : vector<512xf32>
    %48 = vector.multi_reduction <maximumf>, %47, %cst_36 [0] : vector<8x512xf32> to vector<512xf32>
    %49 = vector.shape_cast %48 : vector<512xf32> to vector<1x512xf32>
    %50 = vector.broadcast %49 : vector<1x512xf32> to vector<8x512xf32>
    %51 = arith.subf %47, %50 : vector<8x512xf32>
    %52 = math.exp %51 : vector<8x512xf32>
    %cst_37 = arith.constant dense<0.000000e+00> : vector<512xf32>
    %53 = vector.multi_reduction <add>, %52, %cst_37 [0] : vector<8x512xf32> to vector<512xf32>
    %54 = vector.shape_cast %53 : vector<512xf32> to vector<1x512xf32>
    %55 = tpu.reciprocal %54 {approx = true} : vector<1x512xf32> -> vector<1x512xf32>
    %56 = vector.broadcast %55 : vector<1x512xf32> to vector<8x512xf32>
    %57 = arith.mulf %52, %56 : vector<8x512xf32>
    %58 = arith.truncf %42 : vector<16x8xf32> to vector<16x8xbf16>
    %59 = arith.truncf %57 : vector<8x512xf32> to vector<8x512xbf16>
    %cst_38 = arith.constant dense<0.000000e+00> : vector<16x512xf32>
    %60 = tpu.matmul %58, %59, %cst_38 {dimension_numbers = #tpu.dot_dimension_numbers<[1], [0], [0], [1], [0, 0, 1, 1], [], []>} : vector<16x8xbf16>, vector<8x512xbf16>, vector<16x512xf32> -> vector<16x512xf32>
    %c0_39 = arith.constant 0 : index
    %c0_40 = arith.constant 0 : index
    %61 = vector.load %arg14[%c0_39, %c0_40] : memref<16x32xbf16, #tpu.memory_space<vmem>>, vector<16x32xbf16>
    %62 = arith.truncf %60 : vector<16x512xf32> to vector<16x512xbf16>
    %cst_41 = arith.constant dense<0.000000e+00> : vector<32x512xf32>
    %63 = tpu.matmul %61, %62, %cst_41 {dimension_numbers = #tpu.dot_dimension_numbers<[0], [0], [1], [1], [0, 1, 1, 1], [], []>} : vector<16x32xbf16>, vector<16x512xbf16>, vector<32x512xf32> -> vector<32x512xf32>
    %c0_42 = arith.constant 0 : index
    %c0_43 = arith.constant 0 : index
    %64 = vector.load %arg15[%c0_42, %c0_43] : memref<32x1xf32, #tpu.memory_space<vmem>>, vector<32x1xf32>
    %65 = vector.broadcast %64 : vector<32x1xf32> to vector<32x512xf32>
    %66 = arith.addf %63, %65 : vector<32x512xf32>
    %cst_44 = arith.constant 0.000000e+00 : f32
    %67 = vector.broadcast %cst_44 : f32 to vector<32x512xf32>
    %68 = arith.maximumf %66, %67 : vector<32x512xf32>
    %c0_45 = arith.constant 0 : index
    %c0_46 = arith.constant 0 : index
    %c0_47 = arith.constant 0 : index
    %69 = vector.load %arg16[%c0_45, %c0_46, %c0_47] : memref<1x32x512xf32, #tpu.memory_space<vmem>>, vector<1x32x512xf32>
    %70 = vector.shape_cast %69 : vector<1x32x512xf32> to vector<32x512xf32>
    %71 = vector.shape_cast %68 : vector<32x512xf32> to vector<1x32x512xf32>
    tpu.vector_store %arg16[%c0_45, %c0_46, %c0_47], %71 {strides = array<i32>} : memref<1x32x512xf32, #tpu.memory_space<vmem>>, vector<1x32x512xf32>,
    return
  }
  func.func @transform_0(%arg0: i32, %arg1: i32) -> (i32, i32, i32) {
    %c0_i32 = arith.constant 0 : i32
    %c0_i32_0 = arith.constant 0 : i32
    return %arg0, %c0_i32, %arg1 : i32, i32, i32
  }
  func.func @transform_1(%arg0: i32, %arg1: i32) -> (i32, i32, i32) {
    %c0_i32 = arith.constant 0 : i32
    %c0_i32_0 = arith.constant 0 : i32
    %c0_i32_1 = arith.constant 0 : i32
    return %arg0, %c0_i32, %c0_i32_0 : i32, i32, i32
  }
  func.func @transform_2(%arg0: i32, %arg1: i32) -> (i32, i32) {
    %c0_i32 = arith.constant 0 : i32
    %c0_i32_0 = arith.constant 0 : i32
    %c0_i32_1 = arith.constant 0 : i32
    return %c0_i32, %c0_i32_0 : i32, i32
  }
  func.func @transform_3(%arg0: i32, %arg1: i32) -> (i32, i32) {
    %c0_i32 = arith.constant 0 : i32
    %c0_i32_0 = arith.constant 0 : i32
    %c0_i32_1 = arith.constant 0 : i32
    return %c0_i32, %c0_i32_0 : i32, i32
  }
  func.func @transform_4(%arg0: i32, %arg1: i32) -> (i32, i32) {
    %c0_i32 = arith.constant 0 : i32
    %c0_i32_0 = arith.constant 0 : i32
    %c0_i32_1 = arith.constant 0 : i32
    return %c0_i32, %c0_i32_0 : i32, i32
  }
  func.func @transform_5(%arg0: i32, %arg1: i32) -> (i32, i32) {
    %c0_i32 = arith.constant 0 : i32
    %c0_i32_0 = arith.constant 0 : i32
    %c0_i32_1 = arith.constant 0 : i32
    return %c0_i32, %c0_i32_0 : i32, i32
  }
  func.func @transform_6(%arg0: i32, %arg1: i32) -> (i32, i32) {
    %c0_i32 = arith.constant 0 : i32
    %c0_i32_0 = arith.constant 0 : i32
    %c0_i32_1 = arith.constant 0 : i32
    return %c0_i32, %c0_i32_0 : i32, i32
  }
  func.func @transform_7(%arg0: i32, %arg1: i32) -> (i32, i32) {
    %c0_i32 = arith.constant 0 : i32
    %c0_i32_0 = arith.constant 0 : i32
    %c0_i32_1 = arith.constant 0 : i32
    return %c0_i32, %c0_i32_0 : i32, i32
  }
  func.func @transform_8(%arg0: i32, %arg1: i32) -> (i32, i32) {
    %c0_i32 = arith.constant 0 : i32
    %c0_i32_0 = arith.constant 0 : i32
    %c0_i32_1 = arith.constant 0 : i32
    return %c0_i32, %c0_i32_0 : i32, i32
  }
  func.func @transform_9(%arg0: i32, %arg1: i32) -> (i32, i32) {
    %c0_i32 = arith.constant 0 : i32
    %c0_i32_0 = arith.constant 0 : i32
    %c0_i32_1 = arith.constant 0 : i32
    return %c0_i32, %c0_i32_0 : i32, i32
  }
  func.func @transform_10(%arg0: i32, %arg1: i32) -> (i32, i32) {
    %c0_i32 = arith.constant 0 : i32
    %c0_i32_0 = arith.constant 0 : i32
    %c0_i32_1 = arith.constant 0 : i32
    return %c0_i32, %c0_i32_0 : i32, i32
  }
  func.func @transform_11(%arg0: i32, %arg1: i32) -> (i32, i32) {
    %c0_i32 = arith.constant 0 : i32
    %c0_i32_0 = arith.constant 0 : i32
    %c0_i32_1 = arith.constant 0 : i32
    return %c0_i32, %c0_i32_0 : i32, i32
  }
  func.func @transform_12(%arg0: i32, %arg1: i32) -> (i32, i32) {
    %c0_i32 = arith.constant 0 : i32
    %c0_i32_0 = arith.constant 0 : i32
    %c0_i32_1 = arith.constant 0 : i32
    return %c0_i32, %c0_i32_0 : i32, i32
  }
  func.func @transform_13(%arg0: i32, %arg1: i32) -> (i32, i32) {
    %c0_i32 = arith.constant 0 : i32
    %c0_i32_0 = arith.constant 0 : i32
    %c0_i32_1 = arith.constant 0 : i32
    return %c0_i32, %c0_i32_0 : i32, i32
  }
  func.func @transform_14(%arg0: i32, %arg1: i32) -> (i32, i32, i32) {
    %c0_i32 = arith.constant 0 : i32
    %c0_i32_0 = arith.constant 0 : i32
    return %arg0, %c0_i32, %arg1 : i32, i32, i32
  }
}

</mosaic_0001>

<llo_original>
// kernel: tpu_custom_call.1
$region0: #{tpu_custom_call.1}
  #allocation0 [shape = 'u32[]', space=smem, size = 0x4, offset = 0x4, fixed_abs, tag = 'smem constant byte address 0x4 - core index']
  #allocation1 [shape = 'u32[144,128]{1,0:T(1,128)}', space=vmem, size = 0x12000, scoped, tag = 'internal scratch']
  %s0 = inlined_call_operand.hbm [shape: f32[2,32,1024], index: 0, kind: input, shape index: {}]
  %s1 = inlined_call_operand.vmem [shape: f32[2,32,8], index: 1, kind: input, shape index: {}]
  %s2 = inlined_call_operand.vmem [shape: bf16[32,16], index: 2, kind: input, shape index: {}]
  %s3 = inlined_call_operand.vmem [shape: f32[16,1], index: 3, kind: input, shape index: {}]
  %s4 = inlined_call_operand.vmem [shape: bf16[16,16], index: 4, kind: input, shape index: {}]
  %s5 = inlined_call_operand.vmem [shape: f32[16,1], index: 5, kind: input, shape index: {}]
  %s6 = inlined_call_operand.vmem [shape: bf16[32,16], index: 6, kind: input, shape index: {}]
  %s7 = inlined_call_operand.vmem [shape: f32[16,1], index: 7, kind: input, shape index: {}]
  %s8 = inlined_call_operand.vmem [shape: bf16[16,16], index: 8, kind: input, shape index: {}]
  %s9 = inlined_call_operand.vmem [shape: f32[16,1], index: 9, kind: input, shape index: {}]
  %s10 = inlined_call_operand.vmem [shape: bf16[32,16], index: 10, kind: input, shape index: {}]
  %s11 = inlined_call_operand.vmem [shape: f32[16,1], index: 11, kind: input, shape index: {}]
  %s12 = inlined_call_operand.vmem [shape: bf16[16,32], index: 12, kind: input, shape index: {}]
  %s13 = inlined_call_operand.vmem [shape: f32[32,1], index: 13, kind: input, shape index: {}]
  %s14 = inlined_call_operand.hbm [shape: f32[2,32,1024], index: 14, kind: output, shape index: {}]
  %s15 = sld [smem:[#allocation0]]
  $region93: #{tpu_custom_call.1} parent=0
    _
  %s17 = ssub.s32 1, %s15
  %s18 = scalar_select 0, %s17, %s15
  $region1: #{tpu_custom_call.1} parent=0
    #allocation2 [shape = 'u8[131072]{0}', space=vmem, size = 0x20000, scoped, tag = 'input window, operand 0']
    #allocation3 [shape = 's32[2]{0}', space=sflag, size = 0x8, scoped, tag = 'scoped memory for tpu_custom_call.1']
    #allocation4 [shape = 's32[2]{0}', space=sflag, size = 0x8, scoped, tag = 'scoped memory for tpu_custom_call.1']
    #allocation5 [shape = 'u8[131072]{0}', space=vmem, size = 0x20000, scoped, tag = 'output window, operand 0']
    %19 = vsyncpa [#allocation3], 0
    %s20 = scalar_lea.sflag [#allocation3], 1
    %21 = vsyncpa %s20, 0
    %22 = vsyncpa [#allocation4], 0
    %s23 = scalar_lea.sflag [#allocation4], 1
    %24 = vsyncpa %s23, 0
    loop: start=0, step=1, limit=6
    $region2: #{tpu_custom_call.1} parent=1 // loop_pre_header
      _
    $region3: #{tpu_custom_call.1} parent=1 // loop_header
      %s26 = sphi 0, %s30
      %p27 = scmp.ge.s32.totalorder %s26, 6
      %s33 = sphi 0, %s45
      %s34 = sphi 0, %s41
      %s35 = sphi 0, %s33
      %s36 = sphi 0, %s34
      %s37 = sphi 0, %s35
      %s38 = sphi 0, %s36
      %s50 = sphi 0, %s52
      %s53 = sphi 0, %s50
      %s54 = sphi 0, %s53
      %s70 = sphi 0, %s54
      %s76 = sphi 0, %s78
      %s79 = sphi 0, %s76
      %s80 = sphi 0, %s79
      %s96 = sphi 0, %s80
      %s100 = sphi 0, %s100
      %s102 = sphi 0, %s100
      %s103 = sphi 0, %s102
      %s117 = sphi 0, %s103
      %s121 = sphi 0, %s121
      %s123 = sphi 0, %s121
      %s124 = sphi 0, %s123
      %s138 = sphi 0, %s124
      %s142 = sphi 0, %s142
      %s144 = sphi 0, %s142
      %s145 = sphi 0, %s144
      %s159 = sphi 0, %s145
      %s163 = sphi 0, %s163
      %s165 = sphi 0, %s163
      %s166 = sphi 0, %s165
      %s180 = sphi 0, %s166
      %s184 = sphi 0, %s184
      %s186 = sphi 0, %s184
      %s187 = sphi 0, %s186
      %s201 = sphi 0, %s187
      %s205 = sphi 0, %s205
      %s207 = sphi 0, %s205
      %s208 = sphi 0, %s207
      %s222 = sphi 0, %s208
      %s226 = sphi 0, %s226
      %s228 = sphi 0, %s226
      %s229 = sphi 0, %s228
      %s243 = sphi 0, %s229
      %s247 = sphi 0, %s247
      %s249 = sphi 0, %s247
      %s250 = sphi 0, %s249
      %s264 = sphi 0, %s250
      %s268 = sphi 0, %s268
      %s270 = sphi 0, %s268
      %s271 = sphi 0, %s270
      %s285 = sphi 0, %s271
      %s289 = sphi 0, %s289
      %s291 = sphi 0, %s289
      %s292 = sphi 0, %s291
      %s306 = sphi 0, %s292
      %s310 = sphi 0, %s310
      %s312 = sphi 0, %s310
      %s313 = sphi 0, %s312
      %s327 = sphi 0, %s313
      %s331 = sphi 0, %s331
      %s333 = sphi 0, %s331
      %s334 = sphi 0, %s333
      %s348 = sphi 0, %s334
      %s356 = sphi 0, %s358
      %s359 = sphi 0, %s356
      %s360 = sphi 0, %s359
      %s376 = sphi 0, %s360
    $region4: #{tpu_custom_call.1} parent=1 // loop_header_branch
      %29 = sbr.rel (%p27) target = $region8
    $region5: #{tpu_custom_call.1} parent=1 // loop_body
      %s31 = ssub.s32 %s26, 1
      %s32 = ssub.s32 %s26, 2
      %s39 = sadd.s32 1, %s34
      %p40 = scmp.ge.s32.totalorder %s39, 2
      %s41 = scalar_select %p40, 0, %s39
      %s42 = sadd.s32 1, %s33
      %s43 = scalar_select %p40, %s42, %s33
      %p44 = scmp.ge.s32.totalorder %s43, 2
      %s45 = scalar_select %p44, 0, %s43
      %s46 = ssub.s32 %s33, %s45
      %s47 = ssub.s32 %s34, %s41
      %s48 = sor.u32 %s46, %s47
      %p49 = scmp.eq.s32.totalorder %s48, 0
      %s51 = sadd.s32 %s50, 1
      %s52 = scalar_select %p49, %s50, %s51
      %p55 = pneg %p49
      %p56 = scmp.eq.s32.totalorder %s26, 3
      %p57 = por %p55, %p56
      %p58 = scmp.ne.s32.totalorder %s50, %s53
      %p59 = scmp.eq.s32.totalorder %s26, 0
      %p60 = por %p58, %p59
      %p61 = scmp.ne.s32.totalorder %s50, %s53
      %p62 = scmp.eq.s32.totalorder %s31, 3
      %p63 = por %p61, %p62
      %p64 = scmp.ne.s32.totalorder %s53, %s54
      %p65 = scmp.eq.s32.totalorder %s31, 0
      %p66 = por %p64, %p65
      %p67 = scmp.ne.s32.totalorder %s53, %s54
      %p68 = scmp.eq.s32.totalorder %s32, 3
      %p69 = por %p67, %p68
      %p71 = scmp.ne.s32.totalorder %s54, %s70
      %p72 = scmp.eq.s32.totalorder %s32, 0
      %p73 = por %p71, %p72
      %s74 = ssub.s32 %s33, %s45
      %p75 = scmp.eq.s32.totalorder %s74, 0
      %s77 = sadd.s32 %s76, 1
      %s78 = scalar_select %p75, %s76, %s77
      %p81 = pneg %p75
      %p82 = scmp.eq.s32.totalorder %s26, 3
      %p83 = por %p81, %p82
      %p84 = scmp.ne.s32.totalorder %s76, %s79
      %p85 = scmp.eq.s32.totalorder %s26, 0
      %p86 = por %p84, %p85
      %p87 = scmp.ne.s32.totalorder %s76, %s79
      %p88 = scmp.eq.s32.totalorder %s31, 3
      %p89 = por %p87, %p88
      %p90 = scmp.ne.s32.totalorder %s79, %s80
      %p91 = scmp.eq.s32.totalorder %s31, 0
      %p92 = por %p90, %p91
      %p93 = scmp.ne.s32.totalorder %s79, %s80
      %p94 = scmp.eq.s32.totalorder %s32, 3
      %p95 = por %p93, %p94
      %p97 = scmp.ne.s32.totalorder %s80, %s96
      %p98 = scmp.eq.s32.totalorder %s32, 0
      %p99 = por %p97, %p98
      %s101 = sadd.s32 %s100, 1
      %p104 = scmp.eq.s32.totalorder %s26, 3
      %p105 = scmp.ne.s32.totalorder %s100, %s102
      %p106 = scmp.eq.s32.totalorder %s26, 0
      %p107 = por %p105, %p106
      %p108 = scmp.ne.s32.totalorder %s100, %s102
      %p109 = scmp.eq.s32.totalorder %s31, 3
      %p110 = por %p108, %p109
      %p111 = scmp.ne.s32.totalorder %s102, %s103
      %p112 = scmp.eq.s32.totalorder %s31, 0
      %p113 = por %p111, %p112
      %p114 = scmp.ne.s32.totalorder %s102, %s103
      %p115 = scmp.eq.s32.totalorder %s32, 3
      %p116 = por %p114, %p115
      %p118 = scmp.ne.s32.totalorder %s103, %s117
      %p119 = scmp.eq.s32.totalorder %s32, 0
      %p120 = por %p118, %p119
      %s122 = sadd.s32 %s121, 1
      %p125 = scmp.eq.s32.totalorder %s26, 3
      %p126 = scmp.ne.s32.totalorder %s121, %s123
      %p127 = scmp.eq.s32.totalorder %s26, 0
      %p128 = por %p126, %p127
      %p129 = scmp.ne.s32.totalorder %s121, %s123
      %p130 = scmp.eq.s32.totalorder %s31, 3
      %p131 = por %p129, %p130
      %p132 = scmp.ne.s32.totalorder %s123, %s124
      %p133 = scmp.eq.s32.totalorder %s31, 0
      %p134 = por %p132, %p133
      %p135 = scmp.ne.s32.totalorder %s123, %s124
      %p136 = scmp.eq.s32.totalorder %s32, 3
      %p137 = por %p135, %p136
      %p139 = scmp.ne.s32.totalorder %s124, %s138
      %p140 = scmp.eq.s32.totalorder %s32, 0
      %p141 = por %p139, %p140
      %s143 = sadd.s32 %s142, 1
      %p146 = scmp.eq.s32.totalorder %s26, 3
      %p147 = scmp.ne.s32.totalorder %s142, %s144
      %p148 = scmp.eq.s32.totalorder %s26, 0
      %p149 = por %p147, %p148
      %p150 = scmp.ne.s32.totalorder %s142, %s144
      %p151 = scmp.eq.s32.totalorder %s31, 3
      %p152 = por %p150, %p151
      %p153 = scmp.ne.s32.totalorder %s144, %s145
      %p154 = scmp.eq.s32.totalorder %s31, 0
      %p155 = por %p153, %p154
      %p156 = scmp.ne.s32.totalorder %s144, %s145
      %p157 = scmp.eq.s32.totalorder %s32, 3
      %p158 = por %p156, %p157
      %p160 = scmp.ne.s32.totalorder %s145, %s159
      %p161 = scmp.eq.s32.totalorder %s32, 0
      %p162 = por %p160, %p161
      %s164 = sadd.s32 %s163, 1
      %p167 = scmp.eq.s32.totalorder %s26, 3
      %p168 = scmp.ne.s32.totalorder %s163, %s165
      %p169 = scmp.eq.s32.totalorder %s26, 0
      %p170 = por %p168, %p169
      %p171 = scmp.ne.s32.totalorder %s163, %s165
      %p172 = scmp.eq.s32.totalorder %s31, 3
      %p173 = por %p171, %p172
      %p174 = scmp.ne.s32.totalorder %s165, %s166
      %p175 = scmp.eq.s32.totalorder %s31, 0
      %p176 = por %p174, %p175
      %p177 = scmp.ne.s32.totalorder %s165, %s166
      %p178 = scmp.eq.s32.totalorder %s32, 3
      %p179 = por %p177, %p178
      %p181 = scmp.ne.s32.totalorder %s166, %s180
      %p182 = scmp.eq.s32.totalorder %s32, 0
      %p183 = por %p181, %p182
      %s185 = sadd.s32 %s184, 1
      %p188 = scmp.eq.s32.totalorder %s26, 3
      %p189 = scmp.ne.s32.totalorder %s184, %s186
      %p190 = scmp.eq.s32.totalorder %s26, 0
      %p191 = por %p189, %p190
      %p192 = scmp.ne.s32.totalorder %s184, %s186
      %p193 = scmp.eq.s32.totalorder %s31, 3
      %p194 = por %p192, %p193
      %p195 = scmp.ne.s32.totalorder %s186, %s187
      %p196 = scmp.eq.s32.totalorder %s31, 0
      %p197 = por %p195, %p196
      %p198 = scmp.ne.s32.totalorder %s186, %s187
      %p199 = scmp.eq.s32.totalorder %s32, 3
      %p200 = por %p198, %p199
      %p202 = scmp.ne.s32.totalorder %s187, %s201
      %p203 = scmp.eq.s32.totalorder %s32, 0
      %p204 = por %p202, %p203
      %s206 = sadd.s32 %s205, 1
      %p209 = scmp.eq.s32.totalorder %s26, 3
      %p210 = scmp.ne.s32.totalorder %s205, %s207
      %p211 = scmp.eq.s32.totalorder %s26, 0
      %p212 = por %p210, %p211
      %p213 = scmp.ne.s32.totalorder %s205, %s207
      %p214 = scmp.eq.s32.totalorder %s31, 3
      %p215 = por %p213, %p214
      %p216 = scmp.ne.s32.totalorder %s207, %s208
      %p217 = scmp.eq.s32.totalorder %s31, 0
      %p218 = por %p216, %p217
      %p219 = scmp.ne.s32.totalorder %s207, %s208
      %p220 = scmp.eq.s32.totalorder %s32, 3
      %p221 = por %p219, %p220
      %p223 = scmp.ne.s32.totalorder %s208, %s222
      %p224 = scmp.eq.s32.totalorder %s32, 0
      %p225 = por %p223, %p224
      %s227 = sadd.s32 %s226, 1
      %p230 = scmp.eq.s32.totalorder %s26, 3
      %p231 = scmp.ne.s32.totalorder %s226, %s228
      %p232 = scmp.eq.s32.totalorder %s26, 0
      %p233 = por %p231, %p232
      %p234 = scmp.ne.s32.totalorder %s226, %s228
      %p235 = scmp.eq.s32.totalorder %s31, 3
      %p236 = por %p234, %p235
      %p237 = scmp.ne.s32.totalorder %s228, %s229
      %p238 = scmp.eq.s32.totalorder %s31, 0
      %p239 = por %p237, %p238
      %p240 = scmp.ne.s32.totalorder %s228, %s229
      %p241 = scmp.eq.s32.totalorder %s32, 3
      %p242 = por %p240, %p241
      %p244 = scmp.ne.s32.totalorder %s229, %s243
      %p245 = scmp.eq.s32.totalorder %s32, 0
      %p246 = por %p244, %p245
      %s248 = sadd.s32 %s247, 1
      %p251 = scmp.eq.s32.totalorder %s26, 3
      %p252 = scmp.ne.s32.totalorder %s247, %s249
      %p253 = scmp.eq.s32.totalorder %s26, 0
      %p254 = por %p252, %p253
      %p255 = scmp.ne.s32.totalorder %s247, %s249
      %p256 = scmp.eq.s32.totalorder %s31, 3
      %p257 = por %p255, %p256
      %p258 = scmp.ne.s32.totalorder %s249, %s250
      %p259 = scmp.eq.s32.totalorder %s31, 0
      %p260 = por %p258, %p259
      %p261 = scmp.ne.s32.totalorder %s249, %s250
      %p262 = scmp.eq.s32.totalorder %s32, 3
      %p263 = por %p261, %p262
      %p265 = scmp.ne.s32.totalorder %s250, %s264
      %p266 = scmp.eq.s32.totalorder %s32, 0
      %p267 = por %p265, %p266
      %s269 = sadd.s32 %s268, 1
      %p272 = scmp.eq.s32.totalorder %s26, 3
      %p273 = scmp.ne.s32.totalorder %s268, %s270
      %p274 = scmp.eq.s32.totalorder %s26, 0
      %p275 = por %p273, %p274
      %p276 = scmp.ne.s32.totalorder %s268, %s270
      %p277 = scmp.eq.s32.totalorder %s31, 3
      %p278 = por %p276, %p277
      %p279 = scmp.ne.s32.totalorder %s270, %s271
      %p280 = scmp.eq.s32.totalorder %s31, 0
      %p281 = por %p279, %p280
      %p282 = scmp.ne.s32.totalorder %s270, %s271
      %p283 = scmp.eq.s32.totalorder %s32, 3
      %p284 = por %p282, %p283
      %p286 = scmp.ne.s32.totalorder %s271, %s285
      %p287 = scmp.eq.s32.totalorder %s32, 0
      %p288 = por %p286, %p287
      %s290 = sadd.s32 %s289, 1
      %p293 = scmp.eq.s32.totalorder %s26, 3
      %p294 = scmp.ne.s32.totalorder %s289, %s291
      %p295 = scmp.eq.s32.totalorder %s26, 0
      %p296 = por %p294, %p295
      %p297 = scmp.ne.s32.totalorder %s289, %s291
      %p298 = scmp.eq.s32.totalorder %s31, 3
      %p299 = por %p297, %p298
      %p300 = scmp.ne.s32.totalorder %s291, %s292
      %p301 = scmp.eq.s32.totalorder %s31, 0
      %p302 = por %p300, %p301
      %p303 = scmp.ne.s32.totalorder %s291, %s292
      %p304 = scmp.eq.s32.totalorder %s32, 3
      %p305 = por %p303, %p304
      %p307 = scmp.ne.s32.totalorder %s292, %s306
      %p308 = scmp.eq.s32.totalorder %s32, 0
      %p309 = por %p307, %p308
      %s311 = sadd.s32 %s310, 1
      %p314 = scmp.eq.s32.totalorder %s26, 3
      %p315 = scmp.ne.s32.totalorder %s310, %s312
      %p316 = scmp.eq.s32.totalorder %s26, 0
      %p317 = por %p315, %p316
      %p318 = scmp.ne.s32.totalorder %s310, %s312
      %p319 = scmp.eq.s32.totalorder %s31, 3
      %p320 = por %p318, %p319
      %p321 = scmp.ne.s32.totalorder %s312, %s313
      %p322 = scmp.eq.s32.totalorder %s31, 0
      %p323 = por %p321, %p322
      %p324 = scmp.ne.s32.totalorder %s312, %s313
      %p325 = scmp.eq.s32.totalorder %s32, 3
      %p326 = por %p324, %p325
      %p328 = scmp.ne.s32.totalorder %s313, %s327
      %p329 = scmp.eq.s32.totalorder %s32, 0
      %p330 = por %p328, %p329
      %s332 = sadd.s32 %s331, 1
      %p335 = scmp.eq.s32.totalorder %s26, 3
      %p336 = scmp.ne.s32.totalorder %s331, %s333
      %p337 = scmp.eq.s32.totalorder %s26, 0
      %p338 = por %p336, %p337
      %p339 = scmp.ne.s32.totalorder %s331, %s333
      %p340 = scmp.eq.s32.totalorder %s31, 3
      %p341 = por %p339, %p340
      %p342 = scmp.ne.s32.totalorder %s333, %s334
      %p343 = scmp.eq.s32.totalorder %s31, 0
      %p344 = por %p342, %p343
      %p345 = scmp.ne.s32.totalorder %s333, %s334
      %p346 = scmp.eq.s32.totalorder %s32, 3
      %p347 = por %p345, %p346
      %p349 = scmp.ne.s32.totalorder %s334, %s348
      %p350 = scmp.eq.s32.totalorder %s32, 0
      %p351 = por %p349, %p350
      %s352 = ssub.s32 %s33, %s45
      %s353 = ssub.s32 %s34, %s41
      %s354 = sor.u32 %s352, %s353
      %p355 = scmp.eq.s32.totalorder %s354, 0
      %s357 = sadd.s32 %s356, 1
      %s358 = scalar_select %p355, %s356, %s357
      %p361 = pneg %p355
      %p362 = scmp.eq.s32.totalorder %s26, 3
      %p363 = por %p361, %p362
      %p364 = scmp.ne.s32.totalorder %s356, %s359
      %p365 = scmp.eq.s32.totalorder %s26, 0
      %p366 = por %p364, %p365
      %p367 = scmp.ne.s32.totalorder %s356, %s359
      %p368 = scmp.eq.s32.totalorder %s31, 3
      %p369 = por %p367, %p368
      %p370 = scmp.ne.s32.totalorder %s359, %s360
      %p371 = scmp.eq.s32.totalorder %s31, 0
      %p372 = por %p370, %p371
      %p373 = scmp.ne.s32.totalorder %s359, %s360
      %p374 = scmp.eq.s32.totalorder %s32, 3
      %p375 = por %p373, %p374
      %p377 = scmp.ne.s32.totalorder %s360, %s376
      %p378 = scmp.eq.s32.totalorder %s32, 0
      %p379 = por %p377, %p378
      %p380 = scmp.le.s32.totalorder 1, %s26
      %p381 = scmp.lt.s32.totalorder %s26, 5
      %p382 = pnand %p380, %p381
      %p383 = pneg %p382
      // Predicated region
      $region9: #{tpu_custom_call.1} parent=5 // pred_check
        _
      $region10: #{tpu_custom_call.1} parent=5 // pred_check_branch
        %385 = sbr.rel (%p382) target = $region12
      $region11: #{tpu_custom_call.1} parent=5 // pred_region
        %s386 = ssub.s32 %s26, 1
        // Predicated region
        $region13: #{tpu_custom_call.1} parent=11 // pred_check
          %p387 = pneg %p113
        $region14: #{tpu_custom_call.1} parent=11 // pred_check_branch
          %389 = sbr.rel (%p387) target = $region16
        $region15: #{tpu_custom_call.1} parent=11 // pred_region
          _
        $region16: #{tpu_custom_call.1} parent=11 // pred_fallthru
          _
        // Predicated region
        $region17: #{tpu_custom_call.1} parent=11 // pred_check
          %p390 = pneg %p134
        $region18: #{tpu_custom_call.1} parent=11 // pred_check_branch
          %392 = sbr.rel (%p390) target = $region20
        $region19: #{tpu_custom_call.1} parent=11 // pred_region
          _
        $region20: #{tpu_custom_call.1} parent=11 // pred_fallthru
          _
        // Predicated region
        $region21: #{tpu_custom_call.1} parent=11 // pred_check
          %p393 = pneg %p155
        $region22: #{tpu_custom_call.1} parent=11 // pred_check_branch
          %395 = sbr.rel (%p393) target = $region24
        $region23: #{tpu_custom_call.1} parent=11 // pred_region
          _
        $region24: #{tpu_custom_call.1} parent=11 // pred_fallthru
          _
        // Predicated region
        $region25: #{tpu_custom_call.1} parent=11 // pred_check
          %p396 = pneg %p176
        $region26: #{tpu_custom_call.1} parent=11 // pred_check_branch
          %398 = sbr.rel (%p396) target = $region28
        $region27: #{tpu_custom_call.1} parent=11 // pred_region
          _
        $region28: #{tpu_custom_call.1} parent=11 // pred_fallthru
          _
        // Predicated region
        $region29: #{tpu_custom_call.1} parent=11 // pred_check
          %p399 = pneg %p197
        $region30: #{tpu_custom_call.1} parent=11 // pred_check_branch
          %401 = sbr.rel (%p399) target = $region32
        $region31: #{tpu_custom_call.1} parent=11 // pred_region
          _
        $region32: #{tpu_custom_call.1} parent=11 // pred_fallthru
          _
        // Predicated region
        $region33: #{tpu_custom_call.1} parent=11 // pred_check
          %p402 = pneg %p218
        $region34: #{tpu_custom_call.1} parent=11 // pred_check_branch
          %404 = sbr.rel (%p402) target = $region36
        $region35: #{tpu_custom_call.1} parent=11 // pred_region
          _
        $region36: #{tpu_custom_call.1} parent=11 // pred_fallthru
          _
        // Predicated region
        $region37: #{tpu_custom_call.1} parent=11 // pred_check
          %p405 = pneg %p239
        $region38: #{tpu_custom_call.1} parent=11 // pred_check_branch
          %407 = sbr.rel (%p405) target = $region40
        $region39: #{tpu_custom_call.1} parent=11 // pred_region
          _
        $region40: #{tpu_custom_call.1} parent=11 // pred_fallthru
          _
        // Predicated region
        $region41: #{tpu_custom_call.1} parent=11 // pred_check
          %p408 = pneg %p260
        $region42: #{tpu_custom_call.1} parent=11 // pred_check_branch
          %410 = sbr.rel (%p408) target = $region44
        $region43: #{tpu_custom_call.1} parent=11 // pred_region
          _
        $region44: #{tpu_custom_call.1} parent=11 // pred_fallthru
          _
        // Predicated region
        $region45: #{tpu_custom_call.1} parent=11 // pred_check
          %p411 = pneg %p281
        $region46: #{tpu_custom_call.1} parent=11 // pred_check_branch
          %413 = sbr.rel (%p411) target = $region48
        $region47: #{tpu_custom_call.1} parent=11 // pred_region
          _
        $region48: #{tpu_custom_call.1} parent=11 // pred_fallthru
          _
        // Predicated region
        $region49: #{tpu_custom_call.1} parent=11 // pred_check
          %p414 = pneg %p302
        $region50: #{tpu_custom_call.1} parent=11 // pred_check_branch
          %416 = sbr.rel (%p414) target = $region52
        $region51: #{tpu_custom_call.1} parent=11 // pred_region
          _
        $region52: #{tpu_custom_call.1} parent=11 // pred_fallthru
          _
        // Predicated region
        $region53: #{tpu_custom_call.1} parent=11 // pred_check
          %p417 = pneg %p323
        $region54: #{tpu_custom_call.1} parent=11 // pred_check_branch
          %419 = sbr.rel (%p417) target = $region56
        $region55: #{tpu_custom_call.1} parent=11 // pred_region
          _
        $region56: #{tpu_custom_call.1} parent=11 // pred_fallthru
          _
        // Predicated region
        $region57: #{tpu_custom_call.1} parent=11 // pred_check
          %p420 = pneg %p344
        $region58: #{tpu_custom_call.1} parent=11 // pred_check_branch
          %422 = sbr.rel (%p420) target = $region60
        $region59: #{tpu_custom_call.1} parent=11 // pred_region
          _
        $region60: #{tpu_custom_call.1} parent=11 // pred_fallthru
          _
      $region12: #{tpu_custom_call.1} parent=5 // pred_fallthru
        _
      %p423 = scmp.lt.s32.totalorder %s26, 4
      // Predicated region
      $region61: #{tpu_custom_call.1} parent=5 // pred_check
        %p424 = pneg %p423
      $region62: #{tpu_custom_call.1} parent=5 // pred_check_branch
        %426 = sbr.rel (%p424) target = $region64
      $region63: #{tpu_custom_call.1} parent=5 // pred_region
        // Predicated region
        $region65: #{tpu_custom_call.1} parent=63 // pred_check
          %p427 = pneg %p60
        $region66: #{tpu_custom_call.1} parent=63 // pred_check_branch
          %429 = sbr.rel (%p427) target = $region68
        $region67: #{tpu_custom_call.1} parent=63 // pred_region
          %s430 = sand.u32 %s50, 1
          %s431 = scalar_lea.sflag [#allocation3], %s430
          %s432 = sand.u32 %s50, 1
          %s433 = smul.addr %s432, 128
          %s434 = scalar_lea.vmem [#allocation2], %s433
          %s435 = smul.u32 4, %s34
          %s437 = ssub.s32 2048, 2048
          %438 = vsyncadd %s431, %s437
          %s439 = smul.addr %s33, 32
          %s440 = sadd.s32 %s435, %s439
          %s441 = smul.addr %s440, 128
          %s442 = scalar_lea.hbm %s0, %s441
          %s443 = sshll.u32 %s434, 4
          %s444 = int_to_ptr.vmem [resolvable:$true] %s443
          %449 = dma.hbm_to_vmem [thread:$0]  %s442, 2048, %s444, %s431, 1024, 512, 32
        $region68: #{tpu_custom_call.1} parent=63 // pred_fallthru
          _
        // Predicated region
        $region69: #{tpu_custom_call.1} parent=63 // pred_check
          %p450 = pneg %p86
        $region70: #{tpu_custom_call.1} parent=63 // pred_check_branch
          %452 = sbr.rel (%p450) target = $region72
        $region71: #{tpu_custom_call.1} parent=63 // pred_region
          %p453 = scmp.lt.s32.totalorder %s33, 1
          %s454 = scalar_select %p453, %s33, 1
          %s455 = smul.addr %s454, 4
          %s456 = smul.addr %s455, 8
          %s457 = scalar_lea.vmem %s1, %s456
        $region72: #{tpu_custom_call.1} parent=63 // pred_fallthru
          _
      $region64: #{tpu_custom_call.1} parent=5 // pred_fallthru
        _
      %p458 = scmp.le.s32.totalorder 1, %s26
      %p459 = scmp.lt.s32.totalorder %s26, 5
      %p460 = pnand %p458, %p459
      %p461 = pneg %p460
      // Predicated region
      $region73: #{tpu_custom_call.1} parent=5 // pred_check
        _
      $region74: #{tpu_custom_call.1} parent=5 // pred_check_branch
        %463 = sbr.rel (%p460) target = $region76
      $region75: #{tpu_custom_call.1} parent=5 // pred_region
        %s464 = ssub.s32 %s26, 1
        %s465 = sand.u32 %s53, 1
        %s466 = scalar_lea.sflag [#allocation3], %s465
        %s467 = sand.u32 %s53, 1
        %s468 = smul.addr %s467, 128
        %s469 = scalar_lea.vmem [#allocation2], %s468
        // Predicated region
        $region77: #{tpu_custom_call.1} parent=75 // pred_check
          %p470 = pneg %p66
        $region78: #{tpu_custom_call.1} parent=75 // pred_check_branch
          %472 = sbr.rel (%p470) target = $region80
        $region79: #{tpu_custom_call.1} parent=75 // pred_region
          %473 = dma.done %s466, 2048
        $region80: #{tpu_custom_call.1} parent=75 // pred_fallthru
          _
        %s474 = sand.u32 %s53, 1
        %s475 = scalar_lea.sflag [#allocation3], %s474
        %s476 = sand.u32 %s53, 1
        %s477 = smul.addr %s476, 128
        %s478 = scalar_lea.vmem [#allocation2], %s477
        %p479 = pneg %p66
        %p480 = pneg %p63
        %p481 = scmp.lt.s32.totalorder %s35, 1
        %s482 = scalar_select %p481, %s35, 1
        %s483 = smul.addr %s482, 4
        %s484 = smul.addr %s483, 8
        %s485 = scalar_lea.vmem %s1, %s484
        %p486 = pneg %p92
        %p487 = pneg %p89
        %p488 = pneg %p113
        %p489 = pneg %p110
        %p490 = pneg %p134
        %p491 = pneg %p131
        %p492 = pneg %p155
        %p493 = pneg %p152
        %p494 = pneg %p176
        %p495 = pneg %p173
        %p496 = pneg %p197
        %p497 = pneg %p194
        %p498 = pneg %p218
        %p499 = pneg %p215
        %p500 = pneg %p239
        %p501 = pneg %p236
        %p502 = pneg %p260
        %p503 = pneg %p257
        %p504 = pneg %p281
        %p505 = pneg %p278
        %p506 = pneg %p302
        %p507 = pneg %p299
        %p508 = pneg %p323
        %p509 = pneg %p320
        %p510 = pneg %p344
        %p511 = pneg %p341
        %p512 = pneg %p372
        %p513 = pneg %p369
        %s514 = sand.u32 %s359, 1
        %s515 = scalar_lea.sflag [#allocation4], %s514
        %s516 = sand.u32 %s359, 1
        %s517 = smul.addr %s516, 128
        %s518 = scalar_lea.vmem [#allocation5], %s517
        %s519 = smul.u32 4, %s36
        %p520 = scmp.lt.s32.totalorder %s35, 1
        %s521 = scalar_select %p520, %s35, 1
        %s522 = smul.addr %s521, 4
        %s523 = smul.addr %s522, 8
        %s524 = scalar_lea.vmem %s1, %s523
        %s525 = smul.u32 4, %s36
        %v527 = vld [vmem:[%s469] sm:$0xff]
        %v528 = vld [vmem:[%s469 + $0x8] sm:$0xff]
        %v529 = vld [vmem:[%s469 + $0x10] sm:$0xff]
        %v530 = vld [vmem:[%s469 + $0x18] sm:$0xff]
        %v531 = vld [vmem:[%s469 + $0x20] sm:$0xff]
        %v532 = vld [vmem:[%s469 + $0x28] sm:$0xff]
        %v533 = vld [vmem:[%s469 + $0x30] sm:$0xff]
        %v534 = vld [vmem:[%s469 + $0x38] sm:$0xff]
        %v535 = vld [vmem:[%s469 + $0x40] sm:$0xff]
        %v536 = vld [vmem:[%s469 + $0x48] sm:$0xff]
        %v537 = vld [vmem:[%s469 + $0x50] sm:$0xff]
        %v538 = vld [vmem:[%s469 + $0x58] sm:$0xff]
        %v539 = vld [vmem:[%s469 + $0x60] sm:$0xff]
        %v540 = vld [vmem:[%s469 + $0x68] sm:$0xff]
        %v541 = vld [vmem:[%s469 + $0x70] sm:$0xff]
        %v542 = vld [vmem:[%s469 + $0x78] sm:$0xff]
        %v543 = vpack.c.bf16 %v531, %v527
        %v544 = vpack.c.bf16 %v532, %v528
        %v545 = vpack.c.bf16 %v533, %v529
        %v546 = vpack.c.bf16 %v534, %v530
        %v547 = vpack.c.bf16 %v539, %v535
        %v548 = vpack.c.bf16 %v540, %v536
        %v549 = vpack.c.bf16 %v541, %v537
        %v550 = vpack.c.bf16 %v542, %v538
        %v551 = vld [vmem:[%s524] sm:$0xff]
        %v552 = vld [vmem:[%s524 + $0x8] sm:$0xff]
        %v553 = vld [vmem:[%s524 + $0x10] sm:$0xff]
        %v554 = vld [vmem:[%s524 + $0x18] sm:$0xff]
        %v555 = vpack.c.bf16 %v552, %v551
        %v556 = vpack.c.bf16 %v554, %v553
        %v557 = vld [vmem:[%s2] sm:$0xf]
        %v558 = vld [vmem:[%s2 + $0x4] sm:$0xf]
        %v559 = vld [vmem:[%s2 + $0x8] sm:$0xf]
        %v560 = vld [vmem:[%s2 + $0xc] sm:$0xf]
        %v561 = vld [vmem:[%s3] sm:$0xff]
        %v562 = vld [vmem:[%s3 + $0x8] sm:$0xff]
        %564 = vset.pattern.permute.xlu0 0
        %565 = vperm.xlu0 %564, %v561
        %v566 = vpop.permute.xlu0 %565
        %569 = vset.pattern.permute.xlu0 0
        %570 = vperm.xlu0 %569, %v562
        %v571 = vpop.permute.xlu0 %570
        %v577 = vunpack.c.l.b16 %v557
        %v578 = vunpack.c.l.b16 %v558
        %v579 = vunpack.c.l.b16 %v559
        %v580 = vunpack.c.l.b16 %v560
        %v581 = vpack.c.b16 %v578, %v577
        %v582 = vpack.c.b16 %v580, %v579
        %585 = vxpose.xlu0.c.b16.start [1/8] %v581, 128
        %586 = vxpose.xlu0.c.b16.cont [2/8] %v582, 128
        %587 = vxpose.xlu0.c.b16.cont [3/8] 0, 128
        %588 = vxpose.xlu0.c.b16.cont [4/8] 0, 128
        %589 = vxpose.xlu0.c.b16.cont [5/8] 0, 128
        %590 = vxpose.xlu0.c.b16.cont [6/8] 0, 128
        %591 = vxpose.xlu0.c.b16.cont [7/8] 0, 128
        %592 = vxpose.xlu0.c.b16.end [8/8] 0, 128
        %v593 = vpop.trf.xlu0
        %v594 = vpop.trf.xlu0
        %v595 = vpop.trf.xlu0
        %v596 = vpop.trf.xlu0
        %v597 = vpop.trf.xlu0
        %v598 = vpop.trf.xlu0
        %v599 = vpop.trf.xlu0
        %v600 = vpop.trf.xlu0
        %vm601 = vcmask 261120
        %v603 = vsel %vm601, %v593, 0
        %605 = vmatprep.subr.bf16.mxu0 %v544
        %606 = vmatpush1.bf16.msra.mxu0 %v543
        %607 = vmatprep.subr.bf16.mxu0 %v548
        %608 = vmatpush1.bf16.msra.mxu0 %v547
        %609 = vmatprep.subr.bf16.mxu0 0
        %610 = vmatpush1.bf16.msra.mxu0 0
        %611 = vmatprep.subr.bf16.mxu0 0
        %612 = vmatpush1.bf16.msra.mxu0 0
        %613 = vmatprep.subr.bf16.mxu0 0
        %614 = vmatpush1.bf16.msra.mxu0 0
        %615 = vmatprep.subr.bf16.mxu0 0
        %616 = vmatpush1.bf16.msra.mxu0 0
        %617 = vmatprep.subr.bf16.mxu0 0
        %618 = vmatpush1.bf16.msra.mxu0 0
        %619 = vmatprep.subr.bf16.mxu0 0
        %620 = vmatpush1.bf16.msra.mxu0 0
        %621 = vmatprep.subr.bf16.mxu0 0
        %622 = vmatpush1.bf16.msra.mxu0 0
        %623 = vmatprep.subr.bf16.mxu0 0
        %624 = vmatpush1.bf16.msra.mxu0 0
        %625 = vmatprep.subr.bf16.mxu0 0
        %626 = vmatpush1.bf16.msra.mxu0 0
        %627 = vmatprep.subr.bf16.mxu0 0
        %628 = vmatpush1.bf16.msra.mxu0 0
        %629 = vmatprep.subr.bf16.mxu0 0
        %630 = vmatpush1.bf16.msra.mxu0 0
        %631 = vmatprep.subr.bf16.mxu0 0
        %632 = vmatpush1.bf16.msra.mxu0 0
        %633 = vmatprep.subr.bf16.mxu0 0
        %634 = vmatpush1.bf16.msra.mxu0 0
        %635 = vmatprep.subr.bf16.mxu0 0
        %636 = vmatpush1.bf16.msra.mxu0 0
        %637 = vmatprep.mubr.bf16.mxu0 0
        %638 = vmatmul.mubr.bf16.gmra.mrb[0].mxu0 %v603
        %v639 = vpop.f32.mrb[0].mxu0
        %v640 = vadd.f32 %v566, %v639
        %v641 = vpop.f32.mrb[0].mxu0
        %v642 = vadd.f32 %v566, %v641
        %v643 = vpop.f32.mrb[0].mxu0
        %v644 = vadd.f32 %v571, %v643
        %v645 = vpop.f32.mrb[0].mxu0
        %v646 = vadd.f32 %v571, %v645
        %647 = vdwg.mxu0
        %648 = vmatprep.subr.bf16.mxu0 %v546
        %649 = vmatpush1.bf16.msra.mxu0 %v545
        %650 = vmatprep.subr.bf16.mxu0 %v550
        %651 = vmatpush1.bf16.msra.mxu0 %v549
        %652 = vmatprep.subr.bf16.mxu0 0
        %653 = vmatpush1.bf16.msra.mxu0 0
        %654 = vmatprep.subr.bf16.mxu0 0
        %655 = vmatpush1.bf16.msra.mxu0 0
        %656 = vmatprep.subr.bf16.mxu0 0
        %657 = vmatpush1.bf16.msra.mxu0 0
        %658 = vmatprep.subr.bf16.mxu0 0
        %659 = vmatpush1.bf16.msra.mxu0 0
        %660 = vmatprep.subr.bf16.mxu0 0
        %661 = vmatpush1.bf16.msra.mxu0 0
        %662 = vmatprep.subr.bf16.mxu0 0
        %663 = vmatpush1.bf16.msra.mxu0 0
        %664 = vmatprep.subr.bf16.mxu0 0
        %665 = vmatpush1.bf16.msra.mxu0 0
        %666 = vmatprep.subr.bf16.mxu0 0
        %667 = vmatpush1.bf16.msra.mxu0 0
        %668 = vmatprep.subr.bf16.mxu0 0
        %669 = vmatpush1.bf16.msra.mxu0 0
        %670 = vmatprep.subr.bf16.mxu0 0
        %671 = vmatpush1.bf16.msra.mxu0 0
        %672 = vmatprep.subr.bf16.mxu0 0
        %673 = vmatpush1.bf16.msra.mxu0 0
        %674 = vmatprep.subr.bf16.mxu0 0
        %675 = vmatpush1.bf16.msra.mxu0 0
        %676 = vmatprep.subr.bf16.mxu0 0
        %677 = vmatpush1.bf16.msra.mxu0 0
        %678 = vmatprep.subr.bf16.mxu0 0
        %679 = vmatpush1.bf16.msra.mxu0 0
        %680 = vmatprep.mubr.bf16.mxu0 0
        %681 = vmatmul.mubr.bf16.gmra.mrb[0].mxu0 %v603
        %v682 = vpop.f32.mrb[0].mxu0
        %v683 = vadd.f32 %v566, %v682
        %v684 = vpop.f32.mrb[0].mxu0
        %v685 = vadd.f32 %v566, %v684
        %v686 = vpop.f32.mrb[0].mxu0
        %v687 = vadd.f32 %v571, %v686
        %v688 = vpop.f32.mrb[0].mxu0
        %v689 = vadd.f32 %v571, %v688
        %690 = vdwg.mxu0
        %v691 = vmax.f32 %v640, 0.0
        %v692 = vmax.f32 %v642, 0.0
        %v693 = vmax.f32 %v683, 0.0
        %v694 = vmax.f32 %v685, 0.0
        %v695 = vmax.f32 %v644, 0.0
        %v696 = vmax.f32 %v646, 0.0
        %v697 = vmax.f32 %v687, 0.0
        %v698 = vmax.f32 %v689, 0.0
        %v699 = vpack.c.bf16 %v695, %v691
        %v700 = vpack.c.bf16 %v696, %v692
        %v701 = vpack.c.bf16 %v697, %v693
        %v702 = vpack.c.bf16 %v698, %v694
        %v703 = vld [vmem:[%s4] sm:$0xf]
        %v704 = vld [vmem:[%s4 + $0x4] sm:$0xf]
        %v705 = vld [vmem:[%s5] sm:$0xff]
        %v706 = vld [vmem:[%s5 + $0x8] sm:$0xff]
        %708 = vset.pattern.permute.xlu0 0
        %709 = vperm.xlu0 %708, %v705
        %v710 = vpop.permute.xlu0 %709
        %713 = vset.pattern.permute.xlu0 0
        %714 = vperm.xlu0 %713, %v706
        %v715 = vpop.permute.xlu0 %714
        %v719 = vunpack.c.l.b16 %v703
        %v720 = vunpack.c.l.b16 %v704
        %v721 = vpack.c.b16 %v720, %v719
        %723 = vxpose.xlu0.c.b16.start [1/8] %v721, 128
        %724 = vxpose.xlu0.c.b16.cont [2/8] 0, 128
        %725 = vxpose.xlu0.c.b16.cont [3/8] 0, 128
        %726 = vxpose.xlu0.c.b16.cont [4/8] 0, 128
        %727 = vxpose.xlu0.c.b16.cont [5/8] 0, 128
        %728 = vxpose.xlu0.c.b16.cont [6/8] 0, 128
        %729 = vxpose.xlu0.c.b16.cont [7/8] 0, 128
        %730 = vxpose.xlu0.c.b16.end [8/8] 0, 128
        %v731 = vpop.trf.xlu0
        %v732 = vpop.trf.xlu0
        %v733 = vpop.trf.xlu0
        %v734 = vpop.trf.xlu0
        %v735 = vpop.trf.xlu0
        %v736 = vpop.trf.xlu0
        %v737 = vpop.trf.xlu0
        %v738 = vpop.trf.xlu0
        %vm739 = vcmask 130048
        %v741 = vsel %vm739, %v731, 0
        %743 = vmatprep.subr.bf16.mxu0 %v700
        %744 = vmatpush1.bf16.msra.mxu0 %v699
        %745 = vmatprep.subr.bf16.mxu0 0
        %746 = vmatpush1.bf16.msra.mxu0 0
        %747 = vmatprep.subr.bf16.mxu0 0
        %748 = vmatpush1.bf16.msra.mxu0 0
        %749 = vmatprep.subr.bf16.mxu0 0
        %750 = vmatpush1.bf16.msra.mxu0 0
        %751 = vmatprep.subr.bf16.mxu0 0
        %752 = vmatpush1.bf16.msra.mxu0 0
        %753 = vmatprep.subr.bf16.mxu0 0
        %754 = vmatpush1.bf16.msra.mxu0 0
        %755 = vmatprep.subr.bf16.mxu0 0
        %756 = vmatpush1.bf16.msra.mxu0 0
        %757 = vmatprep.subr.bf16.mxu0 0
        %758 = vmatpush1.bf16.msra.mxu0 0
        %759 = vmatprep.subr.bf16.mxu0 0
        %760 = vmatpush1.bf16.msra.mxu0 0
        %761 = vmatprep.subr.bf16.mxu0 0
        %762 = vmatpush1.bf16.msra.mxu0 0
        %763 = vmatprep.subr.bf16.mxu0 0
        %764 = vmatpush1.bf16.msra.mxu0 0
        %765 = vmatprep.subr.bf16.mxu0 0
        %766 = vmatpush1.bf16.msra.mxu0 0
        %767 = vmatprep.subr.bf16.mxu0 0
        %768 = vmatpush1.bf16.msra.mxu0 0
        %769 = vmatprep.subr.bf16.mxu0 0
        %770 = vmatpush1.bf16.msra.mxu0 0
        %771 = vmatprep.subr.bf16.mxu0 0
        %772 = vmatpush1.bf16.msra.mxu0 0
        %773 = vmatprep.subr.bf16.mxu0 0
        %774 = vmatpush1.bf16.msra.mxu0 0
        %775 = vmatprep.mubr.bf16.mxu0 0
        %776 = vmatmul.mubr.bf16.gmra.mrb[0].mxu0 %v741
        %v777 = vpop.f32.mrb[0].mxu0
        %v778 = vadd.f32 %v710, %v777
        %v779 = vpop.f32.mrb[0].mxu0
        %v780 = vadd.f32 %v710, %v779
        %v781 = vpop.f32.mrb[0].mxu0
        %v782 = vadd.f32 %v715, %v781
        %v783 = vpop.f32.mrb[0].mxu0
        %v784 = vadd.f32 %v715, %v783
        %785 = vdwg.mxu0
        %786 = vmatprep.subr.bf16.mxu0 %v702
        %787 = vmatpush1.bf16.msra.mxu0 %v701
        %788 = vmatprep.subr.bf16.mxu0 0
        %789 = vmatpush1.bf16.msra.mxu0 0
        %790 = vmatprep.subr.bf16.mxu0 0
        %791 = vmatpush1.bf16.msra.mxu0 0
        %792 = vmatprep.subr.bf16.mxu0 0
        %793 = vmatpush1.bf16.msra.mxu0 0
        %794 = vmatprep.subr.bf16.mxu0 0
        %795 = vmatpush1.bf16.msra.mxu0 0
        %796 = vmatprep.subr.bf16.mxu0 0
        %797 = vmatpush1.bf16.msra.mxu0 0
        %798 = vmatprep.subr.bf16.mxu0 0
        %799 = vmatpush1.bf16.msra.mxu0 0
        %800 = vmatprep.subr.bf16.mxu0 0
        %801 = vmatpush1.bf16.msra.mxu0 0
        %802 = vmatprep.subr.bf16.mxu0 0
        %803 = vmatpush1.bf16.msra.mxu0 0
        %804 = vmatprep.subr.bf16.mxu0 0
        %805 = vmatpush1.bf16.msra.mxu0 0
        %806 = vmatprep.subr.bf16.mxu0 0
        %807 = vmatpush1.bf16.msra.mxu0 0
        %808 = vmatprep.subr.bf16.mxu0 0
        %809 = vmatpush1.bf16.msra.mxu0 0
        %810 = vmatprep.subr.bf16.mxu0 0
        %811 = vmatpush1.bf16.msra.mxu0 0
        %812 = vmatprep.subr.bf16.mxu0 0
        %813 = vmatpush1.bf16.msra.mxu0 0
        %814 = vmatprep.subr.bf16.mxu0 0
        %815 = vmatpush1.bf16.msra.mxu0 0
        %816 = vmatprep.subr.bf16.mxu0 0
        %817 = vmatpush1.bf16.msra.mxu0 0
        %818 = vmatprep.mubr.bf16.mxu0 0
        %819 = vmatmul.mubr.bf16.gmra.mrb[0].mxu0 %v741
        %v820 = vpop.f32.mrb[0].mxu0
        %v821 = vadd.f32 %v710, %v820
        %v822 = vpop.f32.mrb[0].mxu0
        %v823 = vadd.f32 %v710, %v822
        %v824 = vpop.f32.mrb[0].mxu0
        %v825 = vadd.f32 %v715, %v824
        %v826 = vpop.f32.mrb[0].mxu0
        %v827 = vadd.f32 %v715, %v826
        %828 = vdwg.mxu0
        %v829 = vmax.f32 %v778, 0.0
        %v830 = vmax.f32 %v780, 0.0
        %v831 = vmax.f32 %v821, 0.0
        %v832 = vmax.f32 %v823, 0.0
        %v833 = vmax.f32 %v782, 0.0
        %v834 = vmax.f32 %v784, 0.0
        %v835 = vmax.f32 %v825, 0.0
        %v836 = vmax.f32 %v827, 0.0
        %v837 = vld [vmem:[%s6] sm:$0xf]
        %v838 = vld [vmem:[%s6 + $0x4] sm:$0xf]
        %v839 = vld [vmem:[%s6 + $0x8] sm:$0xf]
        %v840 = vld [vmem:[%s6 + $0xc] sm:$0xf]
        %v841 = vld [vmem:[%s7] sm:$0xff]
        %v842 = vld [vmem:[%s7 + $0x8] sm:$0xff]
        %844 = vset.pattern.permute.xlu0 0
        %845 = vperm.xlu0 %844, %v841
        %v846 = vpop.permute.xlu0 %845
        %849 = vset.pattern.permute.xlu0 0
        %850 = vperm.xlu0 %849, %v842
        %v851 = vpop.permute.xlu0 %850
        %v857 = vunpack.c.l.b16 %v837
        %v858 = vunpack.c.l.b16 %v838
        %v859 = vunpack.c.l.b16 %v839
        %v860 = vunpack.c.l.b16 %v840
        %v861 = vpack.c.b16 %v858, %v857
        %v862 = vpack.c.b16 %v860, %v859
        %865 = vxpose.xlu0.c.b16.start [1/8] %v861, 128
        %866 = vxpose.xlu0.c.b16.cont [2/8] %v862, 128
        %867 = vxpose.xlu0.c.b16.cont [3/8] 0, 128
        %868 = vxpose.xlu0.c.b16.cont [4/8] 0, 128
        %869 = vxpose.xlu0.c.b16.cont [5/8] 0, 128
        %870 = vxpose.xlu0.c.b16.cont [6/8] 0, 128
        %871 = vxpose.xlu0.c.b16.cont [7/8] 0, 128
        %872 = vxpose.xlu0.c.b16.end [8/8] 0, 128
        %v873 = vpop.trf.xlu0
        %v874 = vpop.trf.xlu0
        %v875 = vpop.trf.xlu0
        %v876 = vpop.trf.xlu0
        %v877 = vpop.trf.xlu0
        %v878 = vpop.trf.xlu0
        %v879 = vpop.trf.xlu0
        %v880 = vpop.trf.xlu0
        %v882 = vsel %vm601, %v873, 0
        %884 = vmatprep.subr.bf16.mxu0 0
        %885 = vmatpush1.bf16.msra.mxu0 %v555
        %886 = vmatprep.subr.bf16.mxu0 0
        %887 = vmatpush1.bf16.msra.mxu0 %v556
        %888 = vmatprep.subr.bf16.mxu0 0
        %889 = vmatpush1.bf16.msra.mxu0 0
        %890 = vmatprep.subr.bf16.mxu0 0
        %891 = vmatpush1.bf16.msra.mxu0 0
        %892 = vmatprep.subr.bf16.mxu0 0
        %893 = vmatpush1.bf16.msra.mxu0 0
        %894 = vmatprep.subr.bf16.mxu0 0
        %895 = vmatpush1.bf16.msra.mxu0 0
        %896 = vmatprep.subr.bf16.mxu0 0
        %897 = vmatpush1.bf16.msra.mxu0 0
        %898 = vmatprep.subr.bf16.mxu0 0
        %899 = vmatpush1.bf16.msra.mxu0 0
        %900 = vmatprep.subr.bf16.mxu0 0
        %901 = vmatpush1.bf16.msra.mxu0 0
        %902 = vmatprep.subr.bf16.mxu0 0
        %903 = vmatpush1.bf16.msra.mxu0 0
        %904 = vmatprep.subr.bf16.mxu0 0
        %905 = vmatpush1.bf16.msra.mxu0 0
        %906 = vmatprep.subr.bf16.mxu0 0
        %907 = vmatpush1.bf16.msra.mxu0 0
        %908 = vmatprep.subr.bf16.mxu0 0
        %909 = vmatpush1.bf16.msra.mxu0 0
        %910 = vmatprep.subr.bf16.mxu0 0
        %911 = vmatpush1.bf16.msra.mxu0 0
        %912 = vmatprep.subr.bf16.mxu0 0
        %913 = vmatpush1.bf16.msra.mxu0 0
        %914 = vmatprep.subr.bf16.mxu0 0
        %915 = vmatpush1.bf16.msra.mxu0 0
        %916 = vmatprep.mubr.bf16.mxu0 0
        %917 = vmatmul.mubr.bf16.gmra.mrb[0].mxu0 %v882
        %v918 = vpop.f32.mrb[0].mxu0
        %v919 = vadd.f32 %v846, %v918
        %v920 = vpop.f32.mrb[0].mxu0
        %v921 = vpop.f32.mrb[0].mxu0
        %v922 = vadd.f32 %v851, %v921
        %v923 = vpop.f32.mrb[0].mxu0
        %924 = vdwg.mxu0
        %v925 = vmax.f32 %v919, 0.0
        %v926 = vmax.f32 %v922, 0.0
        %v927 = vpack.c.bf16 %v926, %v925
        %v928 = vld [vmem:[%s8] sm:$0xf]
        %v929 = vld [vmem:[%s8 + $0x4] sm:$0xf]
        %v930 = vld [vmem:[%s9] sm:$0xff]
        %v931 = vld [vmem:[%s9 + $0x8] sm:$0xff]
        %933 = vset.pattern.permute.xlu0 0
        %934 = vperm.xlu0 %933, %v930
        %v935 = vpop.permute.xlu0 %934
        %938 = vset.pattern.permute.xlu0 0
        %939 = vperm.xlu0 %938, %v931
        %v940 = vpop.permute.xlu0 %939
        %v944 = vunpack.c.l.b16 %v928
        %v945 = vunpack.c.l.b16 %v929
        %v946 = vpack.c.b16 %v945, %v944
        %948 = vxpose.xlu0.c.b16.start [1/8] %v946, 128
        %949 = vxpose.xlu0.c.b16.cont [2/8] 0, 128
        %950 = vxpose.xlu0.c.b16.cont [3/8] 0, 128
        %951 = vxpose.xlu0.c.b16.cont [4/8] 0, 128
        %952 = vxpose.xlu0.c.b16.cont [5/8] 0, 128
        %953 = vxpose.xlu0.c.b16.cont [6/8] 0, 128
        %954 = vxpose.xlu0.c.b16.cont [7/8] 0, 128
        %955 = vxpose.xlu0.c.b16.end [8/8] 0, 128
        %v956 = vpop.trf.xlu0
        %v957 = vpop.trf.xlu0
        %v958 = vpop.trf.xlu0
        %v959 = vpop.trf.xlu0
        %v960 = vpop.trf.xlu0
        %v961 = vpop.trf.xlu0
        %v962 = vpop.trf.xlu0
        %v963 = vpop.trf.xlu0
        %v965 = vsel %vm739, %v956, 0
        %967 = vmatprep.subr.bf16.mxu0 0
        %968 = vmatpush1.bf16.msra.mxu0 %v927
        %969 = vmatprep.subr.bf16.mxu0 0
        %970 = vmatpush1.bf16.msra.mxu0 0
        %971 = vmatprep.subr.bf16.mxu0 0
        %972 = vmatpush1.bf16.msra.mxu0 0
        %973 = vmatprep.subr.bf16.mxu0 0
        %974 = vmatpush1.bf16.msra.mxu0 0
        %975 = vmatprep.subr.bf16.mxu0 0
        %976 = vmatpush1.bf16.msra.mxu0 0
        %977 = vmatprep.subr.bf16.mxu0 0
        %978 = vmatpush1.bf16.msra.mxu0 0
        %979 = vmatprep.subr.bf16.mxu0 0
        %980 = vmatpush1.bf16.msra.mxu0 0
        %981 = vmatprep.subr.bf16.mxu0 0
        %982 = vmatpush1.bf16.msra.mxu0 0
        %983 = vmatprep.subr.bf16.mxu0 0
        %984 = vmatpush1.bf16.msra.mxu0 0
        %985 = vmatprep.subr.bf16.mxu0 0
        %986 = vmatpush1.bf16.msra.mxu0 0
        %987 = vmatprep.subr.bf16.mxu0 0
        %988 = vmatpush1.bf16.msra.mxu0 0
        %989 = vmatprep.subr.bf16.mxu0 0
        %990 = vmatpush1.bf16.msra.mxu0 0
        %991 = vmatprep.subr.bf16.mxu0 0
        %992 = vmatpush1.bf16.msra.mxu0 0
        %993 = vmatprep.subr.bf16.mxu0 0
        %994 = vmatpush1.bf16.msra.mxu0 0
        %995 = vmatprep.subr.bf16.mxu0 0
        %996 = vmatpush1.bf16.msra.mxu0 0
        %997 = vmatprep.subr.bf16.mxu0 0
        %998 = vmatpush1.bf16.msra.mxu0 0
        %999 = vmatprep.mubr.bf16.mxu0 0
        %1000 = vmatmul.mubr.bf16.gmra.mrb[0].mxu0 %v965
        %v1001 = vpop.f32.mrb[0].mxu0
        %v1002 = vadd.f32 %v935, %v1001
        %v1003 = vpop.f32.mrb[0].mxu0
        %v1004 = vpop.f32.mrb[0].mxu0
        %v1005 = vadd.f32 %v940, %v1004
        %v1006 = vpop.f32.mrb[0].mxu0
        %1007 = vdwg.mxu0
        %v1008 = vmax.f32 %v1002, 0.0
        %v1009 = vmax.f32 %v1005, 0.0
        %v1010 = vld [vmem:[%s10] sm:$0xf]
        %v1011 = vld [vmem:[%s10 + $0x4] sm:$0xf]
        %v1012 = vld [vmem:[%s10 + $0x8] sm:$0xf]
        %v1013 = vld [vmem:[%s10 + $0xc] sm:$0xf]
        %v1014 = vld [vmem:[%s11] sm:$0xff]
        %v1015 = vld [vmem:[%s11 + $0x8] sm:$0xff]
        %1017 = vset.pattern.permute.xlu0 0
        %1018 = vperm.xlu0 %1017, %v1014
        %v1019 = vpop.permute.xlu0 %1018
        %1022 = vset.pattern.permute.xlu0 0
        %1023 = vperm.xlu0 %1022, %v1015
        %v1024 = vpop.permute.xlu0 %1023
        %v1030 = vunpack.c.l.b16 %v1010
        %v1031 = vunpack.c.l.b16 %v1011
        %v1032 = vunpack.c.l.b16 %v1012
        %v1033 = vunpack.c.l.b16 %v1013
        %v1034 = vpack.c.b16 %v1031, %v1030
        %v1035 = vpack.c.b16 %v1033, %v1032
        %1038 = vxpose.xlu0.c.b16.start [1/8] %v1034, 128
        %1039 = vxpose.xlu0.c.b16.cont [2/8] %v1035, 128
        %1040 = vxpose.xlu0.c.b16.cont [3/8] 0, 128
        %1041 = vxpose.xlu0.c.b16.cont [4/8] 0, 128
        %1042 = vxpose.xlu0.c.b16.cont [5/8] 0, 128
        %1043 = vxpose.xlu0.c.b16.cont [6/8] 0, 128
        %1044 = vxpose.xlu0.c.b16.cont [7/8] 0, 128
        %1045 = vxpose.xlu0.c.b16.end [8/8] 0, 128
        %v1046 = vpop.trf.xlu0
        %v1047 = vpop.trf.xlu0
        %v1048 = vpop.trf.xlu0
        %v1049 = vpop.trf.xlu0
        %v1050 = vpop.trf.xlu0
        %v1051 = vpop.trf.xlu0
        %v1052 = vpop.trf.xlu0
        %v1053 = vpop.trf.xlu0
        %v1055 = vsel %vm601, %v1046, 0
        %1057 = vmatprep.subr.bf16.mxu0 0
        %1058 = vmatpush1.bf16.msra.mxu0 %v555
        %1059 = vmatprep.subr.bf16.mxu0 0
        %1060 = vmatpush1.bf16.msra.mxu0 %v556
        %1061 = vmatprep.subr.bf16.mxu0 0
        %1062 = vmatpush1.bf16.msra.mxu0 0
        %1063 = vmatprep.subr.bf16.mxu0 0
        %1064 = vmatpush1.bf16.msra.mxu0 0
        %1065 = vmatprep.subr.bf16.mxu0 0
        %1066 = vmatpush1.bf16.msra.mxu0 0
        %1067 = vmatprep.subr.bf16.mxu0 0
        %1068 = vmatpush1.bf16.msra.mxu0 0
        %1069 = vmatprep.subr.bf16.mxu0 0
        %1070 = vmatpush1.bf16.msra.mxu0 0
        %1071 = vmatprep.subr.bf16.mxu0 0
        %1072 = vmatpush1.bf16.msra.mxu0 0
        %1073 = vmatprep.subr.bf16.mxu0 0
        %1074 = vmatpush1.bf16.msra.mxu0 0
        %1075 = vmatprep.subr.bf16.mxu0 0
        %1076 = vmatpush1.bf16.msra.mxu0 0
        %1077 = vmatprep.subr.bf16.mxu0 0
        %1078 = vmatpush1.bf16.msra.mxu0 0
        %1079 = vmatprep.subr.bf16.mxu0 0
        %1080 = vmatpush1.bf16.msra.mxu0 0
        %1081 = vmatprep.subr.bf16.mxu0 0
        %1082 = vmatpush1.bf16.msra.mxu0 0
        %1083 = vmatprep.subr.bf16.mxu0 0
        %1084 = vmatpush1.bf16.msra.mxu0 0
        %1085 = vmatprep.subr.bf16.mxu0 0
        %1086 = vmatpush1.bf16.msra.mxu0 0
        %1087 = vmatprep.subr.bf16.mxu0 0
        %1088 = vmatpush1.bf16.msra.mxu0 0
        %1089 = vmatprep.mubr.bf16.mxu0 0
        %1090 = vmatmul.mubr.bf16.gmra.mrb[0].mxu0 %v1055
        %v1091 = vpop.f32.mrb[0].mxu0
        %v1092 = vadd.f32 %v1019, %v1091
        %v1093 = vpop.f32.mrb[0].mxu0
        %v1094 = vpop.f32.mrb[0].mxu0
        %v1095 = vadd.f32 %v1024, %v1094
        %v1096 = vpop.f32.mrb[0].mxu0
        %1097 = vdwg.mxu0
        %v1098 = vmax.f32 %v1092, 0.0
        %v1099 = vmax.f32 %v1095, 0.0
        %v1100 = vpack.c.bf16 %v1009, %v1008
        %v1101 = vpack.c.bf16 %v833, %v829
        %v1102 = vpack.c.bf16 %v834, %v830
        %v1103 = vpack.c.bf16 %v835, %v831
        %v1104 = vpack.c.bf16 %v836, %v832
        %1105 = vxpose.xlu0.c.b16.start [1/8] %v1100, 128
        %1106 = vxpose.xlu0.c.b16.cont [2/8] 0, 128
        %1107 = vxpose.xlu0.c.b16.cont [3/8] 0, 128
        %1108 = vxpose.xlu0.c.b16.cont [4/8] 0, 128
        %1109 = vxpose.xlu0.c.b16.cont [5/8] 0, 128
        %1110 = vxpose.xlu0.c.b16.cont [6/8] 0, 128
        %1111 = vxpose.xlu0.c.b16.cont [7/8] 0, 128
        %1112 = vxpose.xlu0.c.b16.end [8/8] 0, 128
        %v1113 = vpop.trf.xlu0
        %v1114 = vpop.trf.xlu0
        %v1115 = vpop.trf.xlu0
        %v1116 = vpop.trf.xlu0
        %v1117 = vpop.trf.xlu0
        %v1118 = vpop.trf.xlu0
        %v1119 = vpop.trf.xlu0
        %v1120 = vpop.trf.xlu0
        %v1122 = vsel %vm739, %v1113, 0
        %1124 = vmatprep.subr.bf16.mxu0 %v1102
        %1125 = vmatpush1.bf16.msra.mxu0 %v1101
        %1126 = vmatprep.subr.bf16.mxu0 0
        %1127 = vmatpush1.bf16.msra.mxu0 0
        %1128 = vmatprep.subr.bf16.mxu0 0
        %1129 = vmatpush1.bf16.msra.mxu0 0
        %1130 = vmatprep.subr.bf16.mxu0 0
        %1131 = vmatpush1.bf16.msra.mxu0 0
        %1132 = vmatprep.subr.bf16.mxu0 0
        %1133 = vmatpush1.bf16.msra.mxu0 0
        %1134 = vmatprep.subr.bf16.mxu0 0
        %1135 = vmatpush1.bf16.msra.mxu0 0
        %1136 = vmatprep.subr.bf16.mxu0 0
        %1137 = vmatpush1.bf16.msra.mxu0 0
        %1138 = vmatprep.subr.bf16.mxu0 0
        %1139 = vmatpush1.bf16.msra.mxu0 0
        %1140 = vmatprep.subr.bf16.mxu0 0
        %1141 = vmatpush1.bf16.msra.mxu0 0
        %1142 = vmatprep.subr.bf16.mxu0 0
        %1143 = vmatpush1.bf16.msra.mxu0 0
        %1144 = vmatprep.subr.bf16.mxu0 0
        %1145 = vmatpush1.bf16.msra.mxu0 0
        %1146 = vmatprep.subr.bf16.mxu0 0
        %1147 = vmatpush1.bf16.msra.mxu0 0
        %1148 = vmatprep.subr.bf16.mxu0 0
        %1149 = vmatpush1.bf16.msra.mxu0 0
        %1150 = vmatprep.subr.bf16.mxu0 0
        %1151 = vmatpush1.bf16.msra.mxu0 0
        %1152 = vmatprep.subr.bf16.mxu0 0
        %1153 = vmatpush1.bf16.msra.mxu0 0
        %1154 = vmatprep.subr.bf16.mxu0 0
        %1155 = vmatpush1.bf16.msra.mxu0 0
        %1156 = vmatprep.mubr.bf16.mxu0 0
        %1157 = vmatmul.mubr.bf16.gmra.mrb[0].mxu0 %v1122
        %v1158 = vpop.f32.mrb[0].mxu0
        %v1159 = vadd.f32 0.0, %v1158
        %v1160 = vpop.f32.mrb[0].mxu0
        %v1161 = vadd.f32 0.0, %v1160
        %v1162 = vpop.f32.mrb[0].mxu0
        %v1163 = vpop.f32.mrb[0].mxu0
        %1164 = vdwg.mxu0
        %1165 = vmatprep.subr.bf16.mxu0 %v1104
        %1166 = vmatpush1.bf16.msra.mxu0 %v1103
        %1167 = vmatprep.subr.bf16.mxu0 0
        %1168 = vmatpush1.bf16.msra.mxu0 0
        %1169 = vmatprep.subr.bf16.mxu0 0
        %1170 = vmatpush1.bf16.msra.mxu0 0
        %1171 = vmatprep.subr.bf16.mxu0 0
        %1172 = vmatpush1.bf16.msra.mxu0 0
        %1173 = vmatprep.subr.bf16.mxu0 0
        %1174 = vmatpush1.bf16.msra.mxu0 0
        %1175 = vmatprep.subr.bf16.mxu0 0
        %1176 = vmatpush1.bf16.msra.mxu0 0
        %1177 = vmatprep.subr.bf16.mxu0 0
        %1178 = vmatpush1.bf16.msra.mxu0 0
        %1179 = vmatprep.subr.bf16.mxu0 0
        %1180 = vmatpush1.bf16.msra.mxu0 0
        %1181 = vmatprep.subr.bf16.mxu0 0
        %1182 = vmatpush1.bf16.msra.mxu0 0
        %1183 = vmatprep.subr.bf16.mxu0 0
        %1184 = vmatpush1.bf16.msra.mxu0 0
        %1185 = vmatprep.subr.bf16.mxu0 0
        %1186 = vmatpush1.bf16.msra.mxu0 0
        %1187 = vmatprep.subr.bf16.mxu0 0
        %1188 = vmatpush1.bf16.msra.mxu0 0
        %1189 = vmatprep.subr.bf16.mxu0 0
        %1190 = vmatpush1.bf16.msra.mxu0 0
        %1191 = vmatprep.subr.bf16.mxu0 0
        %1192 = vmatpush1.bf16.msra.mxu0 0
        %1193 = vmatprep.subr.bf16.mxu0 0
        %1194 = vmatpush1.bf16.msra.mxu0 0
        %1195 = vmatprep.subr.bf16.mxu0 0
        %1196 = vmatpush1.bf16.msra.mxu0 0
        %1197 = vmatprep.mubr.bf16.mxu0 0
        %1198 = vmatmul.mubr.bf16.gmra.mrb[0].mxu0 %v1122
        %v1199 = vpop.f32.mrb[0].mxu0
        %v1200 = vadd.f32 0.0, %v1199
        %v1201 = vpop.f32.mrb[0].mxu0
        %v1202 = vadd.f32 0.0, %v1201
        %v1203 = vpop.f32.mrb[0].mxu0
        %v1204 = vpop.f32.mrb[0].mxu0
        %1205 = vdwg.mxu0
        %v1206 = vmul.f32 %v1159, 0.25
        %v1207 = vmul.f32 %v1161, 0.25
        %v1208 = vmul.f32 %v1200, 0.25
        %v1209 = vmul.f32 %v1202, 0.25
        %v1210 = vrot.slane %v1206, 4
        %v1211 = vmax.f32 %v1206, %v1210
        %v1212 = vrot.slane %v1211, 2
        %v1213 = vmax.f32 %v1211, %v1212
        %v1214 = vrot.slane %v1213, 1
        %v1215 = vmax.f32 %v1213, %v1214
        %v1216 = vrot.slane %v1207, 4
        %v1217 = vmax.f32 %v1207, %v1216
        %v1218 = vrot.slane %v1217, 2
        %v1219 = vmax.f32 %v1217, %v1218
        %v1220 = vrot.slane %v1219, 1
        %v1221 = vmax.f32 %v1219, %v1220
        %v1222 = vrot.slane %v1208, 4
        %v1223 = vmax.f32 %v1208, %v1222
        %v1224 = vrot.slane %v1223, 2
        %v1225 = vmax.f32 %v1223, %v1224
        %v1226 = vrot.slane %v1225, 1
        %v1227 = vmax.f32 %v1225, %v1226
        %v1228 = vrot.slane %v1209, 4
        %v1229 = vmax.f32 %v1209, %v1228
        %v1230 = vrot.slane %v1229, 2
        %v1231 = vmax.f32 %v1229, %v1230
        %v1232 = vrot.slane %v1231, 1
        %v1233 = vmax.f32 %v1231, %v1232
        %v1234 = vsub.f32 %v1206, %v1215
        %v1235 = vsub.f32 %v1207, %v1221
        %v1236 = vsub.f32 %v1208, %v1227
        %v1237 = vsub.f32 %v1209, %v1233
        %v1238 = vmul.f32 %v1234, 1.442695
        %v1239 = vpow.pop %v1238
        %v1240 = vmul.f32 %v1235, 1.442695
        %v1241 = vpow.pop %v1240
        %v1242 = vmul.f32 %v1236, 1.442695
        %v1243 = vpow.pop %v1242
        %v1244 = vmul.f32 %v1237, 1.442695
        %v1245 = vpow.pop %v1244
        %v1246 = vrot.slane %v1239, 4
        %v1247 = vadd.f32 %v1239, %v1246
        %v1248 = vrot.slane %v1247, 2
        %v1249 = vadd.f32 %v1247, %v1248
        %v1250 = vrot.slane %v1249, 1
        %v1251 = vadd.f32 %v1249, %v1250
        %v1252 = vrot.slane %v1241, 4
        %v1253 = vadd.f32 %v1241, %v1252
        %v1254 = vrot.slane %v1253, 2
        %v1255 = vadd.f32 %v1253, %v1254
        %v1256 = vrot.slane %v1255, 1
        %v1257 = vadd.f32 %v1255, %v1256
        %v1258 = vrot.slane %v1243, 4
        %v1259 = vadd.f32 %v1243, %v1258
        %v1260 = vrot.slane %v1259, 2
        %v1261 = vadd.f32 %v1259, %v1260
        %v1262 = vrot.slane %v1261, 1
        %v1263 = vadd.f32 %v1261, %v1262
        %v1264 = vrot.slane %v1245, 4
        %v1265 = vadd.f32 %v1245, %v1264
        %v1266 = vrot.slane %v1265, 2
        %v1267 = vadd.f32 %v1265, %v1266
        %v1268 = vrot.slane %v1267, 1
        %v1269 = vadd.f32 %v1267, %v1268
        %v1270 = vrcp.pop %v1251
        %v1271 = vrcp.pop %v1257
        %v1272 = vrcp.pop %v1263
        %v1273 = vrcp.pop %v1269
        %v1274 = vmul.f32 %v1239, %v1270
        %v1275 = vmul.f32 %v1241, %v1271
        %v1276 = vmul.f32 %v1243, %v1272
        %v1277 = vmul.f32 %v1245, %v1273
        %v1278 = vpack.c.bf16 %v1099, %v1098
        %v1279 = vpack.c.bf16 %v1274, %v1274
        %v1280 = vpack.c.bf16 %v1275, %v1275
        %v1281 = vpack.c.bf16 %v1276, %v1276
        %v1282 = vpack.c.bf16 %v1277, %v1277
        %vm1283 = vcmask 64512
        %v1285 = vsel %vm1283, %v1278, 0
        %vm1287 = vcmask 1043456
        %v1289 = vsel %vm1287, %v1279, 0
        %v1292 = vsel %vm1287, %v1280, 0
        %v1295 = vsel %vm1287, %v1281, 0
        %v1298 = vsel %vm1287, %v1282, 0
        %1300 = vmatprep.subr.bf16.mxu0 %v1292
        %1301 = vmatpush1.bf16.msra.mxu0 %v1289
        %1302 = vmatprep.subr.bf16.mxu0 0
        %1303 = vmatpush1.bf16.msra.mxu0 0
        %1304 = vmatprep.subr.bf16.mxu0 0
        %1305 = vmatpush1.bf16.msra.mxu0 0
        %1306 = vmatprep.subr.bf16.mxu0 0
        %1307 = vmatpush1.bf16.msra.mxu0 0
        %1308 = vmatprep.subr.bf16.mxu0 0
        %1309 = vmatpush1.bf16.msra.mxu0 0
        %1310 = vmatprep.subr.bf16.mxu0 0
        %1311 = vmatpush1.bf16.msra.mxu0 0
        %1312 = vmatprep.subr.bf16.mxu0 0
        %1313 = vmatpush1.bf16.msra.mxu0 0
        %1314 = vmatprep.subr.bf16.mxu0 0
        %1315 = vmatpush1.bf16.msra.mxu0 0
        %1316 = vmatprep.subr.bf16.mxu0 0
        %1317 = vmatpush1.bf16.msra.mxu0 0
        %1318 = vmatprep.subr.bf16.mxu0 0
        %1319 = vmatpush1.bf16.msra.mxu0 0
        %1320 = vmatprep.subr.bf16.mxu0 0
        %1321 = vmatpush1.bf16.msra.mxu0 0
        %1322 = vmatprep.subr.bf16.mxu0 0
        %1323 = vmatpush1.bf16.msra.mxu0 0
        %1324 = vmatprep.subr.bf16.mxu0 0
        %1325 = vmatpush1.bf16.msra.mxu0 0
        %1326 = vmatprep.subr.bf16.mxu0 0
        %1327 = vmatpush1.bf16.msra.mxu0 0
        %1328 = vmatprep.subr.bf16.mxu0 0
        %1329 = vmatpush1.bf16.msra.mxu0 0
        %1330 = vmatprep.subr.bf16.mxu0 0
        %1331 = vmatpush1.bf16.msra.mxu0 0
        %1332 = vmatprep.mubr.bf16.mxu0 0
        %1333 = vmatmul.mubr.bf16.gmra.mrb[0].mxu0 %v1285
        %v1334 = vpop.f32.mrb[0].mxu0
        %v1335 = vadd.f32 0.0, %v1334
        %v1336 = vpop.f32.mrb[0].mxu0
        %v1337 = vadd.f32 0.0, %v1336
        %v1338 = vpop.f32.mrb[0].mxu0
        %v1339 = vadd.f32 0.0, %v1338
        %v1340 = vpop.f32.mrb[0].mxu0
        %v1341 = vadd.f32 0.0, %v1340
        %1342 = vdwg.mxu0
        %1343 = vmatprep.subr.bf16.mxu0 %v1298
        %1344 = vmatpush1.bf16.msra.mxu0 %v1295
        %1345 = vmatprep.subr.bf16.mxu0 0
        %1346 = vmatpush1.bf16.msra.mxu0 0
        %1347 = vmatprep.subr.bf16.mxu0 0
        %1348 = vmatpush1.bf16.msra.mxu0 0
        %1349 = vmatprep.subr.bf16.mxu0 0
        %1350 = vmatpush1.bf16.msra.mxu0 0
        %1351 = vmatprep.subr.bf16.mxu0 0
        %1352 = vmatpush1.bf16.msra.mxu0 0
        %1353 = vmatprep.subr.bf16.mxu0 0
        %1354 = vmatpush1.bf16.msra.mxu0 0
        %1355 = vmatprep.subr.bf16.mxu0 0
        %1356 = vmatpush1.bf16.msra.mxu0 0
        %1357 = vmatprep.subr.bf16.mxu0 0
        %1358 = vmatpush1.bf16.msra.mxu0 0
        %1359 = vmatprep.subr.bf16.mxu0 0
        %1360 = vmatpush1.bf16.msra.mxu0 0
        %1361 = vmatprep.subr.bf16.mxu0 0
        %1362 = vmatpush1.bf16.msra.mxu0 0
        %1363 = vmatprep.subr.bf16.mxu0 0
        %1364 = vmatpush1.bf16.msra.mxu0 0
        %1365 = vmatprep.subr.bf16.mxu0 0
        %1366 = vmatpush1.bf16.msra.mxu0 0
        %1367 = vmatprep.subr.bf16.mxu0 0
        %1368 = vmatpush1.bf16.msra.mxu0 0
        %1369 = vmatprep.subr.bf16.mxu0 0
        %1370 = vmatpush1.bf16.msra.mxu0 0
        %1371 = vmatprep.subr.bf16.mxu0 0
        %1372 = vmatpush1.bf16.msra.mxu0 0
        %1373 = vmatprep.subr.bf16.mxu0 0
        %1374 = vmatpush1.bf16.msra.mxu0 0
        %1375 = vmatprep.mubr.bf16.mxu0 0
        %1376 = vmatmul.mubr.bf16.gmra.mrb[0].mxu0 %v1285
        %v1377 = vpop.f32.mrb[0].mxu0
        %v1378 = vadd.f32 0.0, %v1377
        %v1379 = vpop.f32.mrb[0].mxu0
        %v1380 = vadd.f32 0.0, %v1379
        %v1381 = vpop.f32.mrb[0].mxu0
        %v1382 = vadd.f32 0.0, %v1381
        %v1383 = vpop.f32.mrb[0].mxu0
        %v1384 = vadd.f32 0.0, %v1383
        %1385 = vdwg.mxu0
        %v1386 = vld [vmem:[%s12] sm:$0xf]
        %v1387 = vld [vmem:[%s12 + $0x4] sm:$0xf]
        %v1388 = vpack.c.bf16 %v1339, %v1335
        %v1389 = vpack.c.bf16 %v1341, %v1337
        %v1390 = vpack.c.bf16 %v1382, %v1378
        %v1391 = vpack.c.bf16 %v1384, %v1380
        %v1392 = vld [vmem:[%s13] sm:$0xff]
        %v1393 = vld [vmem:[%s13 + $0x8] sm:$0xff]
        %v1394 = vld [vmem:[%s13 + $0x10] sm:$0xff]
        %v1395 = vld [vmem:[%s13 + $0x18] sm:$0xff]
        %1397 = vset.pattern.permute.xlu0 0
        %1398 = vperm.xlu0 %1397, %v1392
        %v1399 = vpop.permute.xlu0 %1398
        %1402 = vset.pattern.permute.xlu0 0
        %1403 = vperm.xlu0 %1402, %v1393
        %v1404 = vpop.permute.xlu0 %1403
        %1407 = vset.pattern.permute.xlu0 0
        %1408 = vperm.xlu0 %1407, %v1394
        %v1409 = vpop.permute.xlu0 %1408
        %1412 = vset.pattern.permute.xlu0 0
        %1413 = vperm.xlu0 %1412, %v1395
        %v1414 = vpop.permute.xlu0 %1413
        %v1418 = vunpack.c.l.b16 %v1386
        %v1419 = vunpack.c.l.b16 %v1387
        %v1420 = vpack.c.b16 %v1419, %v1418
        %1422 = vxpose.xlu0.c.b16.start [1/8] %v1420, 128
        %1423 = vxpose.xlu0.c.b16.cont [2/8] 0, 128
        %1424 = vxpose.xlu0.c.b16.cont [3/8] 0, 128
        %1425 = vxpose.xlu0.c.b16.cont [4/8] 0, 128
        %1426 = vxpose.xlu0.c.b16.cont [5/8] 0, 128
        %1427 = vxpose.xlu0.c.b16.cont [6/8] 0, 128
        %1428 = vxpose.xlu0.c.b16.cont [7/8] 0, 128
        %1429 = vxpose.xlu0.c.b16.end [8/8] 0, 128
        %v1430 = vpop.trf.xlu0
        %v1431 = vpop.trf.xlu0
        %v1432 = vpop.trf.xlu0
        %v1433 = vpop.trf.xlu0
        %v1434 = vpop.trf.xlu0
        %v1435 = vpop.trf.xlu0
        %v1436 = vpop.trf.xlu0
        %v1437 = vpop.trf.xlu0
        %v1439 = vsel %vm739, %v1430, 0
        %v1442 = vsel %vm739, %v1431, 0
        %1444 = vmatprep.subr.bf16.mxu0 %v1389
        %1445 = vmatpush1.bf16.msra.mxu0 %v1388
        %1446 = vmatprep.subr.bf16.mxu0 0
        %1447 = vmatpush1.bf16.msra.mxu0 0
        %1448 = vmatprep.subr.bf16.mxu0 0
        %1449 = vmatpush1.bf16.msra.mxu0 0
        %1450 = vmatprep.subr.bf16.mxu0 0
        %1451 = vmatpush1.bf16.msra.mxu0 0
        %1452 = vmatprep.subr.bf16.mxu0 0
        %1453 = vmatpush1.bf16.msra.mxu0 0
        %1454 = vmatprep.subr.bf16.mxu0 0
        %1455 = vmatpush1.bf16.msra.mxu0 0
        %1456 = vmatprep.subr.bf16.mxu0 0
        %1457 = vmatpush1.bf16.msra.mxu0 0
        %1458 = vmatprep.subr.bf16.mxu0 0
        %1459 = vmatpush1.bf16.msra.mxu0 0
        %1460 = vmatprep.subr.bf16.mxu0 0
        %1461 = vmatpush1.bf16.msra.mxu0 0
        %1462 = vmatprep.subr.bf16.mxu0 0
        %1463 = vmatpush1.bf16.msra.mxu0 0
        %1464 = vmatprep.subr.bf16.mxu0 0
        %1465 = vmatpush1.bf16.msra.mxu0 0
        %1466 = vmatprep.subr.bf16.mxu0 0
        %1467 = vmatpush1.bf16.msra.mxu0 0
        %1468 = vmatprep.subr.bf16.mxu0 0
        %1469 = vmatpush1.bf16.msra.mxu0 0
        %1470 = vmatprep.subr.bf16.mxu0 0
        %1471 = vmatpush1.bf16.msra.mxu0 0
        %1472 = vmatprep.subr.bf16.mxu0 0
        %1473 = vmatpush1.bf16.msra.mxu0 0
        %1474 = vmatprep.subr.bf16.mxu0 0
        %1475 = vmatpush1.bf16.msra.mxu0 0
        %1476 = vmatprep.mubr.bf16.mxu0 0
        %1477 = vmatmul.mubr.bf16.gmra.mrb[0].mxu0 %v1439
        %v1478 = vpop.f32.mrb[0].mxu0
        %v1479 = vadd.f32 %v1399, %v1478
        %v1480 = vpop.f32.mrb[0].mxu0
        %v1481 = vadd.f32 %v1399, %v1480
        %v1482 = vpop.f32.mrb[0].mxu0
        %v1483 = vadd.f32 %v1404, %v1482
        %v1484 = vpop.f32.mrb[0].mxu0
        %v1485 = vadd.f32 %v1404, %v1484
        %1486 = vmatprep.mubr.bf16.mxu0 0
        %1487 = vmatmul.mubr.bf16.gmra.mrb[0].mxu0 %v1442
        %v1488 = vpop.f32.mrb[0].mxu0
        %v1489 = vadd.f32 %v1409, %v1488
        %v1490 = vpop.f32.mrb[0].mxu0
        %v1491 = vadd.f32 %v1409, %v1490
        %v1492 = vpop.f32.mrb[0].mxu0
        %v1493 = vadd.f32 %v1414, %v1492
        %v1494 = vpop.f32.mrb[0].mxu0
        %v1495 = vadd.f32 %v1414, %v1494
        %1496 = vdwg.mxu0
        %1497 = vmatprep.subr.bf16.mxu0 %v1391
        %1498 = vmatpush1.bf16.msra.mxu0 %v1390
        %1499 = vmatprep.subr.bf16.mxu0 0
        %1500 = vmatpush1.bf16.msra.mxu0 0
        %1501 = vmatprep.subr.bf16.mxu0 0
        %1502 = vmatpush1.bf16.msra.mxu0 0
        %1503 = vmatprep.subr.bf16.mxu0 0
        %1504 = vmatpush1.bf16.msra.mxu0 0
        %1505 = vmatprep.subr.bf16.mxu0 0
        %1506 = vmatpush1.bf16.msra.mxu0 0
        %1507 = vmatprep.subr.bf16.mxu0 0
        %1508 = vmatpush1.bf16.msra.mxu0 0
        %1509 = vmatprep.subr.bf16.mxu0 0
        %1510 = vmatpush1.bf16.msra.mxu0 0
        %1511 = vmatprep.subr.bf16.mxu0 0
        %1512 = vmatpush1.bf16.msra.mxu0 0
        %1513 = vmatprep.subr.bf16.mxu0 0
        %1514 = vmatpush1.bf16.msra.mxu0 0
        %1515 = vmatprep.subr.bf16.mxu0 0
        %1516 = vmatpush1.bf16.msra.mxu0 0
        %1517 = vmatprep.subr.bf16.mxu0 0
        %1518 = vmatpush1.bf16.msra.mxu0 0
        %1519 = vmatprep.subr.bf16.mxu0 0
        %1520 = vmatpush1.bf16.msra.mxu0 0
        %1521 = vmatprep.subr.bf16.mxu0 0
        %1522 = vmatpush1.bf16.msra.mxu0 0
        %1523 = vmatprep.subr.bf16.mxu0 0
        %1524 = vmatpush1.bf16.msra.mxu0 0
        %1525 = vmatprep.subr.bf16.mxu0 0
        %1526 = vmatpush1.bf16.msra.mxu0 0
        %1527 = vmatprep.subr.bf16.mxu0 0
        %1528 = vmatpush1.bf16.msra.mxu0 0
        %1529 = vmatprep.mubr.bf16.mxu0 0
        %1530 = vmatmul.mubr.bf16.gmra.mrb[0].mxu0 %v1439
        %v1531 = vpop.f32.mrb[0].mxu0
        %v1532 = vadd.f32 %v1399, %v1531
        %v1533 = vpop.f32.mrb[0].mxu0
        %v1534 = vadd.f32 %v1399, %v1533
        %v1535 = vpop.f32.mrb[0].mxu0
        %v1536 = vadd.f32 %v1404, %v1535
        %v1537 = vpop.f32.mrb[0].mxu0
        %v1538 = vadd.f32 %v1404, %v1537
        %1539 = vmatprep.mubr.bf16.mxu0 0
        %1540 = vmatmul.mubr.bf16.gmra.mrb[0].mxu0 %v1442
        %v1541 = vpop.f32.mrb[0].mxu0
        %v1542 = vadd.f32 %v1409, %v1541
        %v1543 = vpop.f32.mrb[0].mxu0
        %v1544 = vadd.f32 %v1409, %v1543
        %v1545 = vpop.f32.mrb[0].mxu0
        %v1546 = vadd.f32 %v1414, %v1545
        %v1547 = vpop.f32.mrb[0].mxu0
        %v1548 = vadd.f32 %v1414, %v1547
        %1549 = vdwg.mxu0
        %v1550 = vmax.f32 %v1479, 0.0
        %v1551 = vmax.f32 %v1481, 0.0
        %v1552 = vmax.f32 %v1532, 0.0
        %v1553 = vmax.f32 %v1534, 0.0
        %v1554 = vmax.f32 %v1483, 0.0
        %v1555 = vmax.f32 %v1485, 0.0
        %v1556 = vmax.f32 %v1536, 0.0
        %v1557 = vmax.f32 %v1538, 0.0
        %v1558 = vmax.f32 %v1489, 0.0
        %v1559 = vmax.f32 %v1491, 0.0
        %v1560 = vmax.f32 %v1542, 0.0
        %v1561 = vmax.f32 %v1544, 0.0
        %v1562 = vmax.f32 %v1493, 0.0
        %v1563 = vmax.f32 %v1495, 0.0
        %v1564 = vmax.f32 %v1546, 0.0
        %v1565 = vmax.f32 %v1548, 0.0
        %1566 = vst [vmem:[%s518] sm:$0xff] %v1550
        %1567 = vst [vmem:[%s518 + $0x8] sm:$0xff] %v1551
        %1568 = vst [vmem:[%s518 + $0x10] sm:$0xff] %v1552
        %1569 = vst [vmem:[%s518 + $0x18] sm:$0xff] %v1553
        %1570 = vst [vmem:[%s518 + $0x20] sm:$0xff] %v1554
        %1571 = vst [vmem:[%s518 + $0x28] sm:$0xff] %v1555
        %1572 = vst [vmem:[%s518 + $0x30] sm:$0xff] %v1556
        %1573 = vst [vmem:[%s518 + $0x38] sm:$0xff] %v1557
        %1574 = vst [vmem:[%s518 + $0x40] sm:$0xff] %v1558
        %1575 = vst [vmem:[%s518 + $0x48] sm:$0xff] %v1559
        %1576 = vst [vmem:[%s518 + $0x50] sm:$0xff] %v1560
        %1577 = vst [vmem:[%s518 + $0x58] sm:$0xff] %v1561
        %1578 = vst [vmem:[%s518 + $0x60] sm:$0xff] %v1562
        %1579 = vst [vmem:[%s518 + $0x68] sm:$0xff] %v1563
        %1580 = vst [vmem:[%s518 + $0x70] sm:$0xff] %v1564
        %1581 = vst [vmem:[%s518 + $0x78] sm:$0xff] %v1565
        %s1582 = sand.u32 %s359, 1
        %s1583 = scalar_lea.sflag [#allocation4], %s1582
        %s1584 = sand.u32 %s359, 1
        %s1585 = smul.addr %s1584, 128
        %s1586 = scalar_lea.vmem [#allocation5], %s1585
        // Predicated region
        $region81: #{tpu_custom_call.1} parent=75 // pred_check
          %p1587 = pneg %p369
        $region82: #{tpu_custom_call.1} parent=75 // pred_check_branch
          %1589 = sbr.rel (%p1587) target = $region84
        $region83: #{tpu_custom_call.1} parent=75 // pred_region
          %s1590 = smul.u32 4, %s36
          %s1592 = ssub.s32 2048, 2048
          %1593 = vsyncadd %s1583, %s1592
          %s1594 = smul.addr %s35, 32
          %s1595 = sadd.s32 %s1590, %s1594
          %s1596 = smul.addr %s1595, 128
          %s1597 = scalar_lea.hbm %s14, %s1596
          %s1598 = sshll.u32 %s1586, 4
          %s1599 = int_to_ptr.vmem [resolvable:$true] %s1598
          %1604 = dma.vmem_to_hbm [thread:$0]  %s1599, 2048, %s1597, %s1583, 512, 1024, 32
        $region84: #{tpu_custom_call.1} parent=75 // pred_fallthru
          _
      $region76: #{tpu_custom_call.1} parent=5 // pred_fallthru
        _
      %p1605 = scmp.le.s32.totalorder 2, %s26
      // Predicated region
      $region85: #{tpu_custom_call.1} parent=5 // pred_check
        %p1606 = pneg %p1605
      $region86: #{tpu_custom_call.1} parent=5 // pred_check_branch
        %1608 = sbr.rel (%p1606) target = $region88
      $region87: #{tpu_custom_call.1} parent=5 // pred_region
        %s1609 = ssub.s32 %s26, 2
        // Predicated region
        $region89: #{tpu_custom_call.1} parent=87 // pred_check
          %p1610 = pneg %p375
        $region90: #{tpu_custom_call.1} parent=87 // pred_check_branch
          %1612 = sbr.rel (%p1610) target = $region92
        $region91: #{tpu_custom_call.1} parent=87 // pred_region
          %s1613 = sand.u32 %s360, 1
          %s1614 = scalar_lea.sflag [#allocation4], %s1613
          %s1615 = sand.u32 %s360, 1
          %s1616 = smul.addr %s1615, 128
          %s1617 = scalar_lea.vmem [#allocation5], %s1616
          %1618 = dma.done %s1614, 2048
        $region92: #{tpu_custom_call.1} parent=87 // pred_fallthru
          _
      $region88: #{tpu_custom_call.1} parent=5 // pred_fallthru
        _
    $region6: #{tpu_custom_call.1} parent=1 // loop_footer
      %s30 = sadd.s32 1, %s26
    $region7: #{tpu_custom_call.1} parent=1 // loop_footer_branch
      %25 = sbr.rel target = $region3
    $region8: #{tpu_custom_call.1} parent=1 // loop_exit
      _
    %1619 = vsyncpa [#allocation3], 1
    %s1620 = scalar_lea.sflag [#allocation3], 1
    %1621 = vsyncpa %s1620, 1
    %1622 = vsyncpa [#allocation4], 1
    %s1623 = scalar_lea.sflag [#allocation4], 1
    %1624 = vsyncpa %s1623, 1

</llo_original>
